<compile_context>
chip_gen: v5e
topology: v5e:2x2
jax: 0.10.0
libtpu: 0.0.40
codegen_flags: <defaults>
</compile_context>

<pallas_src>
import functools

import jax
import jax.numpy as jnp
from jax import lax
from jax.experimental import pallas as pl
from jax.experimental.pallas import tpu as pltpu

EPS = 1e-12  # matches l2normalize: v / (||v|| + eps)

_VMEM = pl.BlockSpec(memory_space=pltpu.MemorySpace.VMEM)
_SMEM = pl.BlockSpec(memory_space=pltpu.MemorySpace.SMEM)


def _round_up(x, m):
    return (x + m - 1) // m * m


def _vmem_budget_bytes():
    """Generation-aware scoped-VMEM budget (v7x: 64 MiB physical, v5e/v6e: 128 MiB)."""
    try:
        cap = pltpu.get_tpu_info().vmem_capacity_bytes
    except Exception:
        cap = 64 << 20  # conservative (v7x-sized) fallback
    return int(cap * 3 // 4)


def _resident_spec(block_shape, index_map, single_buffer):
    """BlockSpec for an operand whose block never changes across the grid.

    Requests single buffering (no double-buffer DMA) when the installed Pallas
    supports pipeline_mode, halving its VMEM footprint.
    """
    if single_buffer:
        try:
            return pl.BlockSpec(block_shape, index_map, pipeline_mode=pl.Buffered(1))
        except Exception:  # older Pallas without pipeline_mode / Buffered
            pass
    return pl.BlockSpec(block_shape, index_map)


# ----------------------------------------------------------------------------
# Kernel 1: spectral-norm power iteration.
#   w2d : (H, Wd) = w_bar.view(C_out, -1)   (f32)
#   u   : (1, H),  v : (1, Wd)
# outputs: inv_sigma (1,1) SMEM scalar, updated u (1,H), updated v (1,Wd).
# ----------------------------------------------------------------------------
def spectral_norm_kernel(w_ref, u_ref, v_ref, inv_sigma_ref, u_out_ref, v_out_ref):
    w = w_ref[...]                      # (H, Wd)
    u = u_ref[...]                      # (1, H)

    # v = l2normalize(W^T u)   (row-vector form: u @ W)
    wu = jnp.dot(u, w, preferred_element_type=jnp.float32)          # (1, Wd)
    v_new = wu / (jnp.sqrt(jnp.sum(wu * wu)) + EPS)

    # u = l2normalize(W v)  -- contract last dims: no XLU transpose of w.
    wv = lax.dot_general(v_new, w, (((1,), (1,)), ((), ())),
                         preferred_element_type=jnp.float32)        # (1, H)
    u_new = wv / (jnp.sqrt(jnp.sum(wv * wv)) + EPS)

    # sigma = u . (W v); emit 1/sigma (exact division, applied in kernel 2).
    sigma = jnp.sum(u_new * wv)
    inv_sigma_ref[0, 0] = 1.0 / sigma
    u_out_ref[...] = u_new
    v_out_ref[...] = v_new


def spectral_norm_pallas(w2d, u, v):
    H, Wd = w2d.shape
    out_shapes = (
        jax.ShapeDtypeStruct((1, 1), jnp.float32),   # inv_sigma
        jax.ShapeDtypeStruct((1, H), jnp.float32),   # u_new
        jax.ShapeDtypeStruct((1, Wd), jnp.float32),  # v_new
    )
    u2 = u.reshape(1, H)
    v2 = v.reshape(1, Wd)
    if u2.dtype != jnp.float32:
        u2 = u2.astype(jnp.float32)
    if v2.dtype != jnp.float32:
        v2 = v2.astype(jnp.float32)
    return pl.pallas_call(
        spectral_norm_kernel,
        out_shape=out_shapes,
        in_specs=[_VMEM, _VMEM, _VMEM],
        out_specs=(_SMEM, _VMEM, _VMEM),
    )(w2d, u2, v2)


# ----------------------------------------------------------------------------
# Kernel 2: fused im2col + conv matmul, lane-dense per-image output.
#   grid = (N, C_in tiles);  C_in axis is the reduction ("arbitrary", last).
# ----------------------------------------------------------------------------
def fused_conv_kernel(sig_ref, w_ref, b_ref, x_ref, o_ref, acc_ref,
                      *, kh, kw, wp, m_wide, n_cin_tiles):
    """x_ref : (1, cin_tile, Hp*Wp) flattened zero-padded image slab (VMEM)
       w_ref : (kh*kw, cin_tile, C_out) weight taps (resident)
       b_ref : (C_out, 1) bias (resident)
       o_ref : (1, C_out, hw_pad) lane-dense "wide" output rows (Wp cols/row)
       acc_ref: (C_out, m_wide) f32 accumulator scratch
    """
    c = pl.program_id(1)

    @pl.when(c == 0)
    def _init():
        acc_ref[...] = jnp.zeros_like(acc_ref)

    # Fused im2col: for tap (i, j) the needed activations are a *contiguous*
    # slice of the flattened padded image, shifted by i*Wp + j.
    partial_sum = None
    for t in range(kh * kw):
        i, j = divmod(t, kw)
        off = i * wp + j
        xs = x_ref[0, :, off:off + m_wide]                 # (cin_tile, m_wide)
        contrib = lax.dot_general(                         # (C_out, m_wide)
            w_ref[t], xs, (((0,), (0,)), ((), ())),
            preferred_element_type=jnp.float32)
        partial_sum = contrib if partial_sum is None else partial_sum + contrib
    acc_ref[...] += partial_sum

    @pl.when(c == n_cin_tiles - 1)
    def _finalize():
        out = acc_ref[...] * sig_ref[0, 0] + b_ref[...]    # 1/sigma, then bias
        o_ref[0, :, :m_wide] = out.astype(o_ref.dtype)


def fused_conv_pallas(inv_sigma, w_k, bias_col, x_flat, *, kh, kw, wp, hw_pad,
                      m_wide, cin_tile, out_dtype, single_buffer_resident=True):
    n, c_in, lin = x_flat.shape
    _, _, c_out = w_k.shape
    assert c_in % cin_tile == 0
    n_ct = c_in // cin_tile

    in_bytes = x_flat.dtype.itemsize
    out_bytes = jnp.dtype(out_dtype).itemsize
    w_bufs = 1 if (single_buffer_resident and n_ct == 1) else 2
    need = (2 * cin_tile * lin * in_bytes              # x slab (double-buffered)
            + 2 * c_out * hw_pad * out_bytes           # output block
            + w_bufs * kh * kw * cin_tile * c_out * in_bytes
            + c_out * m_wide * 4                       # accumulator scratch
            + 2 * c_out * 4                            # bias
            + (4 << 20))                               # Mosaic-internal headroom
    vmem_limit = int(min(max(need, 16 << 20), _vmem_budget_bytes()))

    w_spec = _resident_spec((kh * kw, cin_tile, c_out), lambda i, c: (0, c, 0),
                            single_buffer_resident and n_ct == 1)
    b_spec = _resident_spec((c_out, 1), lambda i, c: (0, 0), single_buffer_resident)

    grid_spec = pltpu.PrefetchScalarGridSpec(
        num_scalar_prefetch=0,
        grid=(n, n_ct),                                # batch (parallel), C_in (reduction)
        in_specs=[
            _SMEM,                                     # inv_sigma (1, 1) scalar
            w_spec,                                    # weight taps, resident
            b_spec,                                    # bias, resident
            pl.BlockSpec((1, cin_tile, lin), lambda i, c: (i, c, 0)),
        ],
        out_specs=pl.BlockSpec((1, c_out, hw_pad), lambda i, c: (i, 0, 0)),
        scratch_shapes=[pltpu.VMEM((c_out, m_wide), jnp.float32)],
    )
    kernel = functools.partial(fused_conv_kernel, kh=kh, kw=kw, wp=wp,
                               m_wide=m_wide, n_cin_tiles=n_ct)
    return pl.pallas_call(
        kernel,
        out_shape=jax.ShapeDtypeStruct((n, c_out, hw_pad), out_dtype),
        grid_spec=grid_spec,
        compiler_params=pltpu.CompilerParams(
            dimension_semantics=("parallel", "arbitrary"),
            vmem_limit_bytes=vmem_limit),
    )(inv_sigma, w_k, bias_col, x_flat)


# ----------------------------------------------------------------------------
# Full forward: SpectralNorm(Conv2d).forward(x) -> (y, u_new, v_new)
# ----------------------------------------------------------------------------
def spectral_norm_conv2d_forward(x, w_bar, bias, u, v, *, stride=1, padding=1,
                                 compute_dtype=jnp.float32, out_dtype=jnp.float32,
                                 cin_tile=None, single_buffer_resident=True):
    assert stride == 1, "fused conv kernel assumes stride=1"
    C_out, C_in, kh, kw = w_bar.shape
    N, C, Hin, Win = x.shape
    assert C == C_in
    K = C_in * kh * kw

    # --- kernel 1: power iteration -> 1/sigma, updated u, v (no weight copy) ---
    w2d = w_bar.reshape(C_out, K)
    if w2d.dtype != jnp.float32:
        w2d = w2d.astype(jnp.float32)
    inv_sigma, u_new, v_new = spectral_norm_pallas(w2d, u, v)

    # --- conv geometry ---------------------------------------------------------
    Hp, Wp = Hin + 2 * padding, Win + 2 * padding
    Hout, Wout = Hp - kh + 1, Wp - kw + 1
    # "wide" output positions: one per (row, padded column); the kw-1 trailing
    # columns of each row are conv-padding garbage, cropped after the kernel.
    m_wide = (Hout - 1) * Wp + Wout
    hw_pad = _round_up(Hout * Wp, 128)             # lane-dense store

    # --- wrapper glue: a single zero-pad of x (1x traffic), no im2col ----------
    x_pad = jnp.pad(x, ((0, 0), (0, 0), (padding, padding), (padding, padding)))
    x_flat = x_pad.reshape(N, C_in, Hp * Wp)
    if x_flat.dtype != compute_dtype:
        x_flat = x_flat.astype(compute_dtype)
    # weight taps laid out (kh*kw, C_in, C_out): contraction dim leads, so the
    # kernel's dot_general needs no transpose and C_in can be grid-tiled.
    w_k = w_bar.transpose(2, 3, 1, 0).reshape(kh * kw, C_in, C_out)
    if w_k.dtype != compute_dtype:
        w_k = w_k.astype(compute_dtype)
    bias_col = bias.reshape(C_out, 1).astype(jnp.float32)

    if cin_tile is None:
        cin_tile = C_in                            # large-C_in convs: pass a multiple of 8
    assert cin_tile == C_in or cin_tile % 8 == 0

    out_wide = fused_conv_pallas(
        inv_sigma, w_k, bias_col, x_flat,
        kh=kh, kw=kw, wp=Wp, hw_pad=hw_pad, m_wide=m_wide, cin_tile=cin_tile,
        out_dtype=out_dtype, single_buffer_resident=single_buffer_resident)

    # crop conv-padding columns: (N, C_out, Hout*Wp) -> NCHW (N, C_out, Hout, Wout)
    y = out_wide[:, :, :Hout * Wp].reshape(N, C_out, Hout, Wp)[..., :Wout]
    return y, u_new.reshape(-1), v_new.reshape(-1)


# ----------------------------------------------------------------------------
# Pure-JAX reference (correctness check only)
# ----------------------------------------------------------------------------
def _reference(x, w_bar, bias, u, v):
    C_out = w_bar.shape[0]
    w2d = w_bar.reshape(C_out, -1)
    v_new = jnp.dot(w2d.T, u)
    v_new = v_new / (jnp.linalg.norm(v_new) + EPS)
    u_new = jnp.dot(w2d, v_new)
    u_new = u_new / (jnp.linalg.norm(u_new) + EPS)
    sigma = jnp.dot(u_new, jnp.dot(w2d, v_new))
    w_norm = w_bar / sigma
    y = lax.conv_general_dilated(
        x, w_norm, window_strides=(1, 1), padding=((1, 1), (1, 1)),
        dimension_numbers=("NCHW", "OIHW", "NCHW"))
    return y + bias[None, :, None, None], u_new, v_new


if __name__ == "__main__":
    key = jax.random.PRNGKey(0)
    k_x, k_w, k_b, k_u, k_v = jax.random.split(key, 5)

    # Conv2d(4 -> 8, kernel 3x3, stride 1, padding 1), input (2, 4, 16, 16) NCHW
    N, C_in, H, W = 2, 4, 16, 16
    C_out, kh, kw = 8, 3, 3

    x = jax.random.normal(k_x, (N, C_in, H, W), dtype=jnp.float32)
    w_bar = jax.random.normal(k_w, (C_out, C_in, kh, kw), dtype=jnp.float32) * 0.1
    bias = jax.random.normal(k_b, (C_out,), dtype=jnp.float32) * 0.01

    # u, v initialized as in _make_params: N(0,1), then l2-normalized
    u0 = jax.random.normal(k_u, (C_out,), dtype=jnp.float32)
    v0 = jax.random.normal(k_v, (C_in * kh * kw,), dtype=jnp.float32)
    u0 = u0 / (jnp.linalg.norm(u0) + EPS)
    v0 = v0 / (jnp.linalg.norm(v0) + EPS)

    # f32 path (module semantics).
    fwd = jax.jit(lambda x_, w_, b_, u_, v_: spectral_norm_conv2d_forward(
        x_, w_, b_, u_, v_))
    y, u_new, v_new = fwd(x, w_bar, bias, u0, v0)
    y = jax.block_until_ready(y)

    y_ref, u_ref, v_ref = _reference(x, w_bar, bias, u0, v0)
    assert y.shape == (N, C_out, H, W)
    assert jnp.allclose(y, y_ref, atol=1e-4, rtol=1e-4)
    assert jnp.allclose(u_new, u_ref, atol=1e-5, rtol=1e-5)
    assert jnp.allclose(v_new, v_ref, atol=1e-5, rtol=1e-5)

    # bf16 MXU-input + bf16-output fast path (f32 accumulation) for v6e/v7x.
    fwd_bf16 = jax.jit(lambda x_, w_, b_, u_, v_: spectral_norm_conv2d_forward(
        x_, w_, b_, u_, v_, compute_dtype=jnp.bfloat16, out_dtype=jnp.bfloat16))
    y16, _, _ = fwd_bf16(x, w_bar, bias, u0, v0)
    y16 = jax.block_until_ready(y16)
    assert jnp.allclose(y16.astype(jnp.float32), y_ref, atol=5e-2, rtol=5e-2)

    print("KERNEL_OK")
</pallas_src>

<mosaic_0001>
module attributes {stable_mosaic.version = 11 : i64} {
  func.func @spectral_norm_kernel(%arg0: memref<8x36xf32, #tpu.memory_space<vmem>>, %arg1: memref<1x8xf32, #tpu.memory_space<vmem>>, %arg2: memref<1x36xf32, #tpu.memory_space<vmem>>, %arg3: memref<1x1xf32, #tpu.memory_space<smem>>, %arg4: memref<1x8xf32, #tpu.memory_space<vmem>>, %arg5: memref<1x36xf32, #tpu.memory_space<vmem>>) attributes {dimension_semantics = [], scalar_prefetch = 0 : i64, scratch_operands = 0 : i64, tpu.core_type = #tpu.core_type<tc>} {
    %c0 = arith.constant 0 : index
    %c0_0 = arith.constant 0 : index
    %0 = vector.load %arg0[%c0, %c0_0] : memref<8x36xf32, #tpu.memory_space<vmem>>, vector<8x36xf32>
    %c0_1 = arith.constant 0 : index
    %c0_2 = arith.constant 0 : index
    %1 = vector.load %arg1[%c0_1, %c0_2] : memref<1x8xf32, #tpu.memory_space<vmem>>, vector<1x8xf32>
    %cst = arith.constant dense<0.000000e+00> : vector<1x36xf32>
    %2 = tpu.matmul %1, %0, %cst {dimension_numbers = #tpu.dot_dimension_numbers<[1], [0], [0], [1], [0, 0, 1, 1], [], []>} : vector<1x8xf32>, vector<8x36xf32>, vector<1x36xf32> -> vector<1x36xf32>
    %3 = arith.mulf %2, %2 : vector<1x36xf32>
    %4 = vector.shape_cast %3 : vector<1x36xf32> to vector<1x1x36xf32>
    %cst_3 = arith.constant dense<0.000000e+00> : vector<1xf32>
    %5 = vector.multi_reduction <add>, %4, %cst_3 [1, 2] : vector<1x1x36xf32> to vector<1xf32>
    %6 = vector.shape_cast %5 : vector<1xf32> to vector<1x1x1xf32>
    %7 = vector.extract %6[0, 0, 0] : f32 from vector<1x1x1xf32>
    %8 = math.sqrt %7 : f32
    %cst_4 = arith.constant 9.99999996E-13 : f32
    %9 = arith.addf %8, %cst_4 : f32
    %10 = vector.broadcast %9 : f32 to vector<1x36xf32>
    %11 = arith.divf %2, %10 : vector<1x36xf32>
    %cst_5 = arith.constant dense<0.000000e+00> : vector<1x8xf32>
    %12 = tpu.matmul %11, %0, %cst_5 {dimension_numbers = #tpu.dot_dimension_numbers<[1], [1], [0], [0], [0, 0, 1, 0], [], []>} : vector<1x36xf32>, vector<8x36xf32>, vector<1x8xf32> -> vector<1x8xf32>
    %13 = arith.mulf %12, %12 : vector<1x8xf32>
    %14 = vector.shape_cast %13 : vector<1x8xf32> to vector<1x1x8xf32>
    %cst_6 = arith.constant dense<0.000000e+00> : vector<1xf32>
    %15 = vector.multi_reduction <add>, %14, %cst_6 [1, 2] : vector<1x1x8xf32> to vector<1xf32>
    %16 = vector.shape_cast %15 : vector<1xf32> to vector<1x1x1xf32>
    %17 = vector.extract %16[0, 0, 0] : f32 from vector<1x1x1xf32>
    %18 = math.sqrt %17 : f32
    %cst_7 = arith.constant 9.99999996E-13 : f32
    %19 = arith.addf %18, %cst_7 : f32
    %20 = vector.broadcast %19 : f32 to vector<1x8xf32>
    %21 = arith.divf %12, %20 : vector<1x8xf32>
    %22 = arith.mulf %21, %12 : vector<1x8xf32>
    %23 = vector.shape_cast %22 : vector<1x8xf32> to vector<1x1x8xf32>
    %cst_8 = arith.constant dense<0.000000e+00> : vector<1xf32>
    %24 = vector.multi_reduction <add>, %23, %cst_8 [1, 2] : vector<1x1x8xf32> to vector<1xf32>
    %25 = vector.shape_cast %24 : vector<1xf32> to vector<1x1x1xf32>
    %26 = vector.extract %25[0, 0, 0] : f32 from vector<1x1x1xf32>
    %cst_9 = arith.constant 1.000000e+00 : f32
    %27 = arith.divf %cst_9, %26 : f32
    %c0_10 = arith.constant 0 : index
    %c0_11 = arith.constant 0 : index
    %28 = memref.load %arg3[%c0_10, %c0_11] : memref<1x1xf32, #tpu.memory_space<smem>>
    memref.store %27, %arg3[%c0_10, %c0_11] : memref<1x1xf32, #tpu.memory_space<smem>>
    %c0_12 = arith.constant 0 : index
    %c0_13 = arith.constant 0 : index
    %29 = vector.load %arg4[%c0_12, %c0_13] : memref<1x8xf32, #tpu.memory_space<vmem>>, vector<1x8xf32>
    tpu.vector_store %arg4[%c0_12, %c0_13], %21 {strides = array<i32>} : memref<1x8xf32, #tpu.memory_space<vmem>>, vector<1x8xf32>,
    %c0_14 = arith.constant 0 : index
    %c0_15 = arith.constant 0 : index
    %30 = vector.load %arg5[%c0_14, %c0_15] : memref<1x36xf32, #tpu.memory_space<vmem>>, vector<1x36xf32>
    tpu.vector_store %arg5[%c0_14, %c0_15], %11 {strides = array<i32>} : memref<1x36xf32, #tpu.memory_space<vmem>>, vector<1x36xf32>,
    return
  }
}

module attributes {stable_mosaic.version = 11 : i64} {
  func.func @fused_conv_kernel(%arg0: i32, %arg1: i32, %arg2: memref<1x1xf32, #tpu.memory_space<smem>>, %arg3: memref<9x4x8xf32, #tpu.memory_space<vmem>>, %arg4: memref<8x1xf32, #tpu.memory_space<vmem>>, %arg5: memref<1x4x324xf32, #tpu.memory_space<vmem>>, %arg6: memref<1x8x384xf32, #tpu.memory_space<vmem>>, %arg7: memref<8x286xf32, #tpu.memory_space<vmem>>) attributes {dimension_semantics = [#tpu.dimension_semantics<parallel>, #tpu.dimension_semantics<arbitrary>], iteration_bounds = array<i64: 2, 1>, scalar_prefetch = 0 : i64, scratch_operands = 1 : i64, tpu.core_type = #tpu.core_type<tc>, window_params = [{transform_indices = @transform_0, window_bounds = array<i64: 1, 1>}, {pipeline_mode = #tpu.pipeline_mode<synchronous>, transform_indices = @transform_1, window_bounds = array<i64: 9, 4, 8>}, {pipeline_mode = #tpu.pipeline_mode<synchronous>, transform_indices = @transform_2, window_bounds = array<i64: 8, 1>}, {transform_indices = @transform_3, window_bounds = array<i64: 1, 4, 324>}, {transform_indices = @transform_4, window_bounds = array<i64: 1, 8, 384>}]} {
    %c0_i32 = arith.constant 0 : i32
    %0 = arith.cmpi eq, %arg1, %c0_i32 : i32
    %1 = arith.extui %0 : i1 to i32
    %c0_i32_0 = arith.constant 0 : i32
    %2 = arith.cmpi ne, %1, %c0_i32_0 : i32
    scf.if %2 {
      %cst_54 = arith.constant 0.000000e+00 : f32
      %62 = vector.broadcast %cst_54 : f32 to vector<8x286xf32>
      %c0_55 = arith.constant 0 : index
      %c0_56 = arith.constant 0 : index
      %63 = vector.load %arg7[%c0_55, %c0_56] : memref<8x286xf32, #tpu.memory_space<vmem>>, vector<8x286xf32>
      tpu.vector_store %arg7[%c0_55, %c0_56], %62 {strides = array<i32>} : memref<8x286xf32, #tpu.memory_space<vmem>>, vector<8x286xf32>,
    } else {
    }
    %c0 = arith.constant 0 : index
    %c0_1 = arith.constant 0 : index
    %c0_2 = arith.constant 0 : index
    %3 = vector.load %arg5[%c0, %c0_1, %c0_2] : memref<1x4x324xf32, #tpu.memory_space<vmem>>, vector<1x4x286xf32>
    %4 = vector.shape_cast %3 : vector<1x4x286xf32> to vector<4x286xf32>
    %c0_3 = arith.constant 0 : index
    %c0_4 = arith.constant 0 : index
    %c0_5 = arith.constant 0 : index
    %5 = vector.load %arg3[%c0_3, %c0_4, %c0_5] : memref<9x4x8xf32, #tpu.memory_space<vmem>>, vector<1x4x8xf32>
    %6 = vector.shape_cast %5 : vector<1x4x8xf32> to vector<4x8xf32>
    %cst = arith.constant dense<0.000000e+00> : vector<8x286xf32>
    %7 = tpu.matmul %6, %4, %cst {dimension_numbers = #tpu.dot_dimension_numbers<[0], [0], [1], [1], [0, 1, 1, 1], [], []>} : vector<4x8xf32>, vector<4x286xf32>, vector<8x286xf32> -> vector<8x286xf32>
    %c0_6 = arith.constant 0 : index
    %c0_7 = arith.constant 0 : index
    %c1 = arith.constant 1 : index
    %8 = vector.load %arg5[%c0_6, %c0_7, %c1] : memref<1x4x324xf32, #tpu.memory_space<vmem>>, vector<1x4x286xf32>
    %9 = vector.shape_cast %8 : vector<1x4x286xf32> to vector<4x286xf32>
    %c1_8 = arith.constant 1 : index
    %c0_9 = arith.constant 0 : index
    %c0_10 = arith.constant 0 : index
    %10 = vector.load %arg3[%c1_8, %c0_9, %c0_10] : memref<9x4x8xf32, #tpu.memory_space<vmem>>, vector<1x4x8xf32>
    %11 = vector.shape_cast %10 : vector<1x4x8xf32> to vector<4x8xf32>
    %cst_11 = arith.constant dense<0.000000e+00> : vector<8x286xf32>
    %12 = tpu.matmul %11, %9, %cst_11 {dimension_numbers = #tpu.dot_dimension_numbers<[0], [0], [1], [1], [0, 1, 1, 1], [], []>} : vector<4x8xf32>, vector<4x286xf32>, vector<8x286xf32> -> vector<8x286xf32>
    %13 = arith.addf %7, %12 : vector<8x286xf32>
    %c0_12 = arith.constant 0 : index
    %c0_13 = arith.constant 0 : index
    %c2 = arith.constant 2 : index
    %14 = vector.load %arg5[%c0_12, %c0_13, %c2] : memref<1x4x324xf32, #tpu.memory_space<vmem>>, vector<1x4x286xf32>
    %15 = vector.shape_cast %14 : vector<1x4x286xf32> to vector<4x286xf32>
    %c2_14 = arith.constant 2 : index
    %c0_15 = arith.constant 0 : index
    %c0_16 = arith.constant 0 : index
    %16 = vector.load %arg3[%c2_14, %c0_15, %c0_16] : memref<9x4x8xf32, #tpu.memory_space<vmem>>, vector<1x4x8xf32>
    %17 = vector.shape_cast %16 : vector<1x4x8xf32> to vector<4x8xf32>
    %cst_17 = arith.constant dense<0.000000e+00> : vector<8x286xf32>
    %18 = tpu.matmul %17, %15, %cst_17 {dimension_numbers = #tpu.dot_dimension_numbers<[0], [0], [1], [1], [0, 1, 1, 1], [], []>} : vector<4x8xf32>, vector<4x286xf32>, vector<8x286xf32> -> vector<8x286xf32>
    %19 = arith.addf %13, %18 : vector<8x286xf32>
    %c0_18 = arith.constant 0 : index
    %c0_19 = arith.constant 0 : index
    %c18 = arith.constant 18 : index
    %20 = vector.load %arg5[%c0_18, %c0_19, %c18] : memref<1x4x324xf32, #tpu.memory_space<vmem>>, vector<1x4x286xf32>
    %21 = vector.shape_cast %20 : vector<1x4x286xf32> to vector<4x286xf32>
    %c3 = arith.constant 3 : index
    %c0_20 = arith.constant 0 : index
    %c0_21 = arith.constant 0 : index
    %22 = vector.load %arg3[%c3, %c0_20, %c0_21] : memref<9x4x8xf32, #tpu.memory_space<vmem>>, vector<1x4x8xf32>
    %23 = vector.shape_cast %22 : vector<1x4x8xf32> to vector<4x8xf32>
    %cst_22 = arith.constant dense<0.000000e+00> : vector<8x286xf32>
    %24 = tpu.matmul %23, %21, %cst_22 {dimension_numbers = #tpu.dot_dimension_numbers<[0], [0], [1], [1], [0, 1, 1, 1], [], []>} : vector<4x8xf32>, vector<4x286xf32>, vector<8x286xf32> -> vector<8x286xf32>
    %25 = arith.addf %19, %24 : vector<8x286xf32>
    %c0_23 = arith.constant 0 : index
    %c0_24 = arith.constant 0 : index
    %c19 = arith.constant 19 : index
    %26 = vector.load %arg5[%c0_23, %c0_24, %c19] : memref<1x4x324xf32, #tpu.memory_space<vmem>>, vector<1x4x286xf32>
    %27 = vector.shape_cast %26 : vector<1x4x286xf32> to vector<4x286xf32>
    %c4 = arith.constant 4 : index
    %c0_25 = arith.constant 0 : index
    %c0_26 = arith.constant 0 : index
    %28 = vector.load %arg3[%c4, %c0_25, %c0_26] : memref<9x4x8xf32, #tpu.memory_space<vmem>>, vector<1x4x8xf32>
    %29 = vector.shape_cast %28 : vector<1x4x8xf32> to vector<4x8xf32>
    %cst_27 = arith.constant dense<0.000000e+00> : vector<8x286xf32>
    %30 = tpu.matmul %29, %27, %cst_27 {dimension_numbers = #tpu.dot_dimension_numbers<[0], [0], [1], [1], [0, 1, 1, 1], [], []>} : vector<4x8xf32>, vector<4x286xf32>, vector<8x286xf32> -> vector<8x286xf32>
    %31 = arith.addf %25, %30 : vector<8x286xf32>
    %c0_28 = arith.constant 0 : index
    %c0_29 = arith.constant 0 : index
    %c20 = arith.constant 20 : index
    %32 = vector.load %arg5[%c0_28, %c0_29, %c20] : memref<1x4x324xf32, #tpu.memory_space<vmem>>, vector<1x4x286xf32>
    %33 = vector.shape_cast %32 : vector<1x4x286xf32> to vector<4x286xf32>
    %c5 = arith.constant 5 : index
    %c0_30 = arith.constant 0 : index
    %c0_31 = arith.constant 0 : index
    %34 = vector.load %arg3[%c5, %c0_30, %c0_31] : memref<9x4x8xf32, #tpu.memory_space<vmem>>, vector<1x4x8xf32>
    %35 = vector.shape_cast %34 : vector<1x4x8xf32> to vector<4x8xf32>
    %cst_32 = arith.constant dense<0.000000e+00> : vector<8x286xf32>
    %36 = tpu.matmul %35, %33, %cst_32 {dimension_numbers = #tpu.dot_dimension_numbers<[0], [0], [1], [1], [0, 1, 1, 1], [], []>} : vector<4x8xf32>, vector<4x286xf32>, vector<8x286xf32> -> vector<8x286xf32>
    %37 = arith.addf %31, %36 : vector<8x286xf32>
    %c0_33 = arith.constant 0 : index
    %c0_34 = arith.constant 0 : index
    %c36 = arith.constant 36 : index
    %38 = vector.load %arg5[%c0_33, %c0_34, %c36] : memref<1x4x324xf32, #tpu.memory_space<vmem>>, vector<1x4x286xf32>
    %39 = vector.shape_cast %38 : vector<1x4x286xf32> to vector<4x286xf32>
    %c6 = arith.constant 6 : index
    %c0_35 = arith.constant 0 : index
    %c0_36 = arith.constant 0 : index
    %40 = vector.load %arg3[%c6, %c0_35, %c0_36] : memref<9x4x8xf32, #tpu.memory_space<vmem>>, vector<1x4x8xf32>
    %41 = vector.shape_cast %40 : vector<1x4x8xf32> to vector<4x8xf32>
    %cst_37 = arith.constant dense<0.000000e+00> : vector<8x286xf32>
    %42 = tpu.matmul %41, %39, %cst_37 {dimension_numbers = #tpu.dot_dimension_numbers<[0], [0], [1], [1], [0, 1, 1, 1], [], []>} : vector<4x8xf32>, vector<4x286xf32>, vector<8x286xf32> -> vector<8x286xf32>
    %43 = arith.addf %37, %42 : vector<8x286xf32>
    %c0_38 = arith.constant 0 : index
    %c0_39 = arith.constant 0 : index
    %c37 = arith.constant 37 : index
    %44 = vector.load %arg5[%c0_38, %c0_39, %c37] : memref<1x4x324xf32, #tpu.memory_space<vmem>>, vector<1x4x286xf32>
    %45 = vector.shape_cast %44 : vector<1x4x286xf32> to vector<4x286xf32>
    %c7 = arith.constant 7 : index
    %c0_40 = arith.constant 0 : index
    %c0_41 = arith.constant 0 : index
    %46 = vector.load %arg3[%c7, %c0_40, %c0_41] : memref<9x4x8xf32, #tpu.memory_space<vmem>>, vector<1x4x8xf32>
    %47 = vector.shape_cast %46 : vector<1x4x8xf32> to vector<4x8xf32>
    %cst_42 = arith.constant dense<0.000000e+00> : vector<8x286xf32>
    %48 = tpu.matmul %47, %45, %cst_42 {dimension_numbers = #tpu.dot_dimension_numbers<[0], [0], [1], [1], [0, 1, 1, 1], [], []>} : vector<4x8xf32>, vector<4x286xf32>, vector<8x286xf32> -> vector<8x286xf32>
    %49 = arith.addf %43, %48 : vector<8x286xf32>
    %c0_43 = arith.constant 0 : index
    %c0_44 = arith.constant 0 : index
    %c38 = arith.constant 38 : index
    %50 = vector.load %arg5[%c0_43, %c0_44, %c38] : memref<1x4x324xf32, #tpu.memory_space<vmem>>, vector<1x4x286xf32>
    %51 = vector.shape_cast %50 : vector<1x4x286xf32> to vector<4x286xf32>
    %c8 = arith.constant 8 : index
    %c0_45 = arith.constant 0 : index
    %c0_46 = arith.constant 0 : index
    %52 = vector.load %arg3[%c8, %c0_45, %c0_46] : memref<9x4x8xf32, #tpu.memory_space<vmem>>, vector<1x4x8xf32>
    %53 = vector.shape_cast %52 : vector<1x4x8xf32> to vector<4x8xf32>
    %cst_47 = arith.constant dense<0.000000e+00> : vector<8x286xf32>
    %54 = tpu.matmul %53, %51, %cst_47 {dimension_numbers = #tpu.dot_dimension_numbers<[0], [0], [1], [1], [0, 1, 1, 1], [], []>} : vector<4x8xf32>, vector<4x286xf32>, vector<8x286xf32> -> vector<8x286xf32>
    %55 = arith.addf %49, %54 : vector<8x286xf32>
    %c0_48 = arith.constant 0 : index
    %c0_49 = arith.constant 0 : index
    %56 = vector.load %arg7[%c0_48, %c0_49] : memref<8x286xf32, #tpu.memory_space<vmem>>, vector<8x286xf32>
    %57 = arith.addf %56, %55 : vector<8x286xf32>
    %c0_50 = arith.constant 0 : index
    %c0_51 = arith.constant 0 : index
    %58 = vector.load %arg7[%c0_50, %c0_51] : memref<8x286xf32, #tpu.memory_space<vmem>>, vector<8x286xf32>
    tpu.vector_store %arg7[%c0_50, %c0_51], %57 {strides = array<i32>} : memref<8x286xf32, #tpu.memory_space<vmem>>, vector<8x286xf32>,
    %c0_i32_52 = arith.constant 0 : i32
    %59 = arith.cmpi eq, %arg1, %c0_i32_52 : i32
    %60 = arith.extui %59 : i1 to i32
    %c0_i32_53 = arith.constant 0 : i32
    %61 = arith.cmpi ne, %60, %c0_i32_53 : i32
    scf.if %61 {
      %c0_54 = arith.constant 0 : index
      %c0_55 = arith.constant 0 : index
      %62 = vector.load %arg7[%c0_54, %c0_55] : memref<8x286xf32, #tpu.memory_space<vmem>>, vector<8x286xf32>
      %c0_56 = arith.constant 0 : index
      %c0_57 = arith.constant 0 : index
      %63 = memref.load %arg2[%c0_56, %c0_57] : memref<1x1xf32, #tpu.memory_space<smem>>
      %64 = vector.broadcast %63 : f32 to vector<8x286xf32>
      %65 = arith.mulf %62, %64 : vector<8x286xf32>
      %c0_58 = arith.constant 0 : index
      %c0_59 = arith.constant 0 : index
      %66 = vector.load %arg4[%c0_58, %c0_59] : memref<8x1xf32, #tpu.memory_space<vmem>>, vector<8x1xf32>
      %67 = vector.broadcast %66 : vector<8x1xf32> to vector<8x286xf32>
      %68 = arith.addf %65, %67 : vector<8x286xf32>
      %c0_60 = arith.constant 0 : index
      %c0_61 = arith.constant 0 : index
      %c0_62 = arith.constant 0 : index
      %69 = vector.load %arg6[%c0_60, %c0_61, %c0_62] : memref<1x8x384xf32, #tpu.memory_space<vmem>>, vector<1x8x286xf32>
      %70 = vector.shape_cast %69 : vector<1x8x286xf32> to vector<8x286xf32>
      %71 = vector.shape_cast %68 : vector<8x286xf32> to vector<1x8x286xf32>
      tpu.vector_store %arg6[%c0_60, %c0_61, %c0_62], %71 {strides = array<i32>} : memref<1x8x384xf32, #tpu.memory_space<vmem>>, vector<1x8x286xf32>,
    } else {
    }
    return
  }
  func.func @transform_0(%arg0: i32, %arg1: i32) -> (i32, i32) {
    %c0_i32 = arith.constant 0 : i32
    %c0_i32_0 = arith.constant 0 : i32
    %c0_i32_1 = arith.constant 0 : i32
    return %c0_i32, %c0_i32_0 : i32, i32
  }
  func.func @transform_1(%arg0: i32, %arg1: i32) -> (i32, i32, i32) {
    %c0_i32 = arith.constant 0 : i32
    %c0_i32_0 = arith.constant 0 : i32
    %c0_i32_1 = arith.constant 0 : i32
    return %c0_i32, %arg1, %c0_i32_0 : i32, i32, i32
  }
  func.func @transform_2(%arg0: i32, %arg1: i32) -> (i32, i32) {
    %c0_i32 = arith.constant 0 : i32
    %c0_i32_0 = arith.constant 0 : i32
    %c0_i32_1 = arith.constant 0 : i32
    return %c0_i32, %c0_i32_0 : i32, i32
  }
  func.func @transform_3(%arg0: i32, %arg1: i32) -> (i32, i32, i32) {
    %c0_i32 = arith.constant 0 : i32
    %c0_i32_0 = arith.constant 0 : i32
    return %arg0, %arg1, %c0_i32 : i32, i32, i32
  }
  func.func @transform_4(%arg0: i32, %arg1: i32) -> (i32, i32, i32) {
    %c0_i32 = arith.constant 0 : i32
    %c0_i32_0 = arith.constant 0 : i32
    %c0_i32_1 = arith.constant 0 : i32
    return %arg0, %c0_i32, %c0_i32_0 : i32, i32, i32
  }
}

</mosaic_0001>

<llo_original>
// kernel: _lambda_.2
$region0: #{_lambda_.2}
  #allocation0 [shape = 'u32[]', space=smem, size = 0x4, offset = 0x4, fixed_abs, tag = 'smem constant byte address 0x4 - core index']
  #allocation1 [shape = 'u32[72,128]{1,0:T(1,128)}', space=vmem, size = 0x9000, scoped, tag = 'internal scratch']
  %s0 = inlined_call_operand.vmem [shape: f32[8,36], index: 0, kind: input, shape index: {}]
  %s1 = inlined_call_operand.vmem [shape: f32[1,8], index: 1, kind: input, shape index: {}]
  %s2 = inlined_call_operand.vmem [shape: f32[1,36], index: 2, kind: input, shape index: {}]
  %s3 = inlined_call_operand.hbm [shape: f32[1,1], index: 3, kind: output, shape index: {0}]
  %s4 = inlined_call_operand.hbm [shape: f32[1,8], index: 4, kind: output, shape index: {1}]
  %s5 = inlined_call_operand.hbm [shape: f32[1,36], index: 5, kind: output, shape index: {2}]
  %6 = xla_tuple %s3, %s4, %s5
  %s7 = sld [smem:[#allocation0]]
  $region38: #{_lambda_.2} parent=0
    _
  %s9 = ssub.s32 1, %s7
  %s10 = scalar_select 0, %s9, %s7
  $region1: #{_lambda_.2} parent=0
    #allocation2 [shape = 'u8[512]{0}', space=smem, size = 0x200, scoped, tag = 'output window, operand 0, single buffered']
    #allocation3 [shape = 's32[1]{0}', space=sflag, size = 0x4, scoped, tag = 'scoped memory for _lambda_.2']
    #allocation4 [shape = 's32[1]{0}', space=sflag, size = 0x4, scoped, tag = 'scoped memory for _lambda_.2']
    #allocation5 [shape = 'u8[512]{0}', space=vmem, size = 0x400, scoped, tag = 'output window, operand 1, single buffered']
    #allocation6 [shape = 'u8[512]{0}', space=vmem, size = 0x400, scoped, tag = 'output window, operand 2, single buffered']
    #allocation7 [shape = 's32[1]{0}', space=sflag, size = 0x4, scoped, tag = 'scoped memory for _lambda_.2']
    %11 = vsyncpa [#allocation4], 0
    %12 = vsyncpa [#allocation3], 0
    %13 = vsyncpa [#allocation7], 0
    // Predicated region
    $region2: #{_lambda_.2} parent=1 // pred_check
      _
    $region3: #{_lambda_.2} parent=1 // pred_check_branch
      %15 = sbr.rel (0) target = $region5
    $region4: #{_lambda_.2} parent=1 // pred_region
      _
    $region5: #{_lambda_.2} parent=1 // pred_fallthru
      _
    // Predicated region
    $region6: #{_lambda_.2} parent=1 // pred_check
      _
    $region7: #{_lambda_.2} parent=1 // pred_check_branch
      %17 = sbr.rel (0) target = $region9
    $region8: #{_lambda_.2} parent=1 // pred_region
      _
    $region9: #{_lambda_.2} parent=1 // pred_fallthru
      _
    // Predicated region
    $region10: #{_lambda_.2} parent=1 // pred_check
      _
    $region11: #{_lambda_.2} parent=1 // pred_check_branch
      %19 = sbr.rel (0) target = $region13
    $region12: #{_lambda_.2} parent=1 // pred_region
      _
    $region13: #{_lambda_.2} parent=1 // pred_fallthru
      _
    %v20 = vld [vmem:[%s0] sm:$0xff]
    %v21 = vld [vmem:[%s1] sm:$0x1]
    %vm22 = vcmask 64512
    %v24 = vsel %vm22, %v21, 0
    %26 = vmatpush.msra.mxu0 0.0
    %27 = vmatpush.msra.mxu0 0.0
    %28 = vmatpush.msra.mxu0 0.0
    %29 = vmatpush.msra.mxu0 0.0
    %30 = vmatpush.msra.mxu0 0.0
    %31 = vmatpush.msra.mxu0 0.0
    %32 = vmatpush.msra.mxu0 0.0
    %33 = vmatpush.msra.mxu0 0.0
    %34 = vmatpush.msra.mxu0 0.0
    %35 = vmatpush.msra.mxu0 0.0
    %36 = vmatpush.msra.mxu0 0.0
    %37 = vmatpush.msra.mxu0 0.0
    %38 = vmatpush.msra.mxu0 0.0
    %39 = vmatpush.msra.mxu0 0.0
    %40 = vmatpush.msra.mxu0 0.0
    %41 = vmatpush.msra.mxu0 %v20
    %42 = vmatmul.f32.gmra.mxu0 %v24
    %v43 = vpop.f32.mrf.mxu0
    %v44 = vadd.f32 0.0, %v43
    %45 = vdwg.mxu0
    %v46 = vmul.f32 %v44, %v44
    %vm47 = vcmask 286720
    %v48 = vsel %vm47, %v46, 0.0
    %49 = vadd.xlane.f32.xlu0 %v48
    %v50 = vpop.xlane.xlu0 %49
    %v51 = vrot.slane %v50, 4
    %v52 = vadd.f32 %v50, %v51
    %v53 = vrot.slane %v52, 2
    %v54 = vadd.f32 %v52, %v53
    %v55 = vrot.slane %v54, 1
    %v56 = vadd.f32 %v54, %v55
    %s57 = vtos %v56
    %v58 = vstv %s57
    %v59 = vrsqrt.pop %v58
    %v60 = vmul.f32 %v59, %v58
    %v61 = vmul.f32 %v60, %v59
    %v62 = vmul.f32 0.5, %v61
    %v63 = vsub.f32 1.5, %v62
    %v64 = vmul.f32 %v59, %v63
    %v65 = vmul.f32 %v58, %v64
    %vm66 = vcmp.eq.f32.partialorder %v58, inf
    %v67 = vsel %vm66, %v58, %v65
    %vm68 = vcmp.eq.f32.partialorder %v58, 0.0
    %v69 = vand.u32 %v58, 2147483648
    %v70 = vsel %vm68, %v69, %v67
    %s71 = vtos %v70
    %s72 = sadd.f32 %s71, 1e-12
    %v73 = vstv %s72
    %v74 = vrcp.pop %v73
    %v75 = vmul.f32 %v73, %v74
    %v76 = vsub.f32 1.0, %v75
    %v77 = vmul.f32 %v74, %v76
    %v78 = vadd.f32 %v74, %v77
    %vm79 = vweird.f32 %v73
    %vm80 = vweird.f32 %v74
    %vm81 = vmor %vm79, %vm80
    %v82 = vsel %vm81, %v74, %v78
    %v83 = vand.u32 2147483647, %v73
    %vm84 = vcmp.eq.f32.partialorder %v83, 8.507059e+37
    %v85 = vand.u32 %v73, 2147483648
    %v86 = vor.u32 1.1754944e-38, %v85
    %v87 = vsel %vm84, %v86, %v82
    %v88 = vmul.f32 %v44, %v87
    %vm89 = vcmask 293888
    %v91 = vsel %vm89, %v88, 0
    %v94 = vsel %vm89, %v20, 0
    %96 = vmatpush.xpose.msra.mxu0 0.0
    %97 = vmatpush.xpose.msra.mxu0 0.0
    %98 = vmatpush.xpose.msra.mxu0 0.0
    %99 = vmatpush.xpose.msra.mxu0 0.0
    %100 = vmatpush.xpose.msra.mxu0 0.0
    %101 = vmatpush.xpose.msra.mxu0 0.0
    %102 = vmatpush.xpose.msra.mxu0 0.0
    %103 = vmatpush.xpose.msra.mxu0 0.0
    %104 = vmatpush.xpose.msra.mxu0 0.0
    %105 = vmatpush.xpose.msra.mxu0 0.0
    %106 = vmatpush.xpose.msra.mxu0 0.0
    %107 = vmatpush.xpose.msra.mxu0 0.0
    %108 = vmatpush.xpose.msra.mxu0 0.0
    %109 = vmatpush.xpose.msra.mxu0 0.0
    %110 = vmatpush.xpose.msra.mxu0 0.0
    %111 = vmatpush.xpose.msra.mxu0 %v94
    %112 = vmatmul.f32.gmra.mxu0 %v91
    %v113 = vpop.f32.mrf.mxu0
    %v114 = vadd.f32 0.0, %v113
    %115 = vdwg.mxu0
    %v116 = vmul.f32 %v114, %v114
    %vm117 = vcmask 57344
    %v118 = vsel %vm117, %v116, 0.0
    %119 = vadd.xlane.f32.xlu0 %v118
    %v120 = vpop.xlane.xlu0 %119
    %v121 = vrot.slane %v120, 4
    %v122 = vadd.f32 %v120, %v121
    %v123 = vrot.slane %v122, 2
    %v124 = vadd.f32 %v122, %v123
    %v125 = vrot.slane %v124, 1
    %v126 = vadd.f32 %v124, %v125
    %s127 = vtos %v126
    %v128 = vstv %s127
    %v129 = vrsqrt.pop %v128
    %v130 = vmul.f32 %v129, %v128
    %v131 = vmul.f32 %v130, %v129
    %v132 = vmul.f32 0.5, %v131
    %v133 = vsub.f32 1.5, %v132
    %v134 = vmul.f32 %v129, %v133
    %v135 = vmul.f32 %v128, %v134
    %vm136 = vcmp.eq.f32.partialorder %v128, inf
    %v137 = vsel %vm136, %v128, %v135
    %vm138 = vcmp.eq.f32.partialorder %v128, 0.0
    %v139 = vand.u32 %v128, 2147483648
    %v140 = vsel %vm138, %v139, %v137
    %s141 = vtos %v140
    %s142 = sadd.f32 %s141, 1e-12
    %v143 = vstv %s142
    %v144 = vrcp.pop %v143
    %v145 = vmul.f32 %v143, %v144
    %v146 = vsub.f32 1.0, %v145
    %v147 = vmul.f32 %v144, %v146
    %v148 = vadd.f32 %v144, %v147
    %vm149 = vweird.f32 %v143
    %vm150 = vweird.f32 %v144
    %vm151 = vmor %vm149, %vm150
    %v152 = vsel %vm151, %v144, %v148
    %v153 = vand.u32 2147483647, %v143
    %vm154 = vcmp.eq.f32.partialorder %v153, 8.507059e+37
    %v155 = vand.u32 %v143, 2147483648
    %v156 = vor.u32 1.1754944e-38, %v155
    %v157 = vsel %vm154, %v156, %v152
    %v158 = vmul.f32 %v114, %v157
    %v159 = vmul.f32 %v158, %v114
    %v160 = vsel %vm117, %v159, 0.0
    %161 = vadd.xlane.f32.xlu0 %v160
    %v162 = vpop.xlane.xlu0 %161
    %v163 = vrot.slane %v162, 4
    %v164 = vadd.f32 %v162, %v163
    %v165 = vrot.slane %v164, 2
    %v166 = vadd.f32 %v164, %v165
    %v167 = vrot.slane %v166, 1
    %v168 = vadd.f32 %v166, %v167
    %s169 = vtos %v168
    %v170 = vstv %s169
    %v171 = vrcp.pop %v170
    %v172 = vmul.f32 %v170, %v171
    %v173 = vsub.f32 1.0, %v172
    %v174 = vmul.f32 %v171, %v173
    %v175 = vadd.f32 %v171, %v174
    %vm176 = vweird.f32 %v170
    %vm177 = vweird.f32 %v171
    %vm178 = vmor %vm176, %vm177
    %v179 = vsel %vm178, %v171, %v175
    %v180 = vand.u32 2147483647, %v170
    %vm181 = vcmp.eq.f32.partialorder %v180, 8.507059e+37
    %v182 = vand.u32 %v170, 2147483648
    %v183 = vor.u32 1.1754944e-38, %v182
    %v184 = vsel %vm181, %v183, %v179
    %s185 = vtos %v184
    %s186 = scalar_lea.smem [#allocation2], 0
    %187 = sst [smem:[%s186]] %s185
    %188 = vst.msk [vmem:[#allocation5] sm:$0x1] %vm117, %v158
    %189 = vst.msk [vmem:[#allocation6] sm:$0x1] %vm47, %v88
    // Predicated region
    $region14: #{_lambda_.2} parent=1 // pred_check
      _
    $region15: #{_lambda_.2} parent=1 // pred_check_branch
      %191 = sbr.rel (0) target = $region17
    $region16: #{_lambda_.2} parent=1 // pred_region
      %193 = vsyncadd [#allocation4], 0
      %s195 = sshll.u32 %s3, 4
      %s196 = int_to_ptr.hbm [resolvable:$true] %s195
      %198 = dma.smem_to_hbm [#allocation2], 16, %s196, [#allocation4]
    $region17: #{_lambda_.2} parent=1 // pred_fallthru
      _
    // Predicated region
    $region18: #{_lambda_.2} parent=1 // pred_check
      _
    $region19: #{_lambda_.2} parent=1 // pred_check_branch
      %200 = sbr.rel (0) target = $region21
    $region20: #{_lambda_.2} parent=1 // pred_region
      %202 = vsyncadd [#allocation3], 0
      %s204 = sshll.u32 [#allocation5], 4
      %s205 = int_to_ptr.vmem [resolvable:$true] %s204
      %s206 = sshll.u32 %s4, 4
      %s207 = int_to_ptr.hbm [resolvable:$true] %s206
      %209 = dma.vmem_to_hbm [thread:$0]  %s205, 16, %s207, [#allocation3]
    $region21: #{_lambda_.2} parent=1 // pred_fallthru
      _
    // Predicated region
    $region22: #{_lambda_.2} parent=1 // pred_check
      _
    $region23: #{_lambda_.2} parent=1 // pred_check_branch
      %211 = sbr.rel (0) target = $region25
    $region24: #{_lambda_.2} parent=1 // pred_region
      %213 = vsyncadd [#allocation7], 0
      %s215 = sshll.u32 [#allocation6], 4
      %s216 = int_to_ptr.vmem [resolvable:$true] %s215
      %s217 = sshll.u32 %s5, 4
      %s218 = int_to_ptr.hbm [resolvable:$true] %s217
      %220 = dma.vmem_to_hbm [thread:$0]  %s216, 16, %s218, [#allocation7]
    $region25: #{_lambda_.2} parent=1 // pred_fallthru
      _
    // Predicated region
    $region26: #{_lambda_.2} parent=1 // pred_check
      _
    $region27: #{_lambda_.2} parent=1 // pred_check_branch
      %222 = sbr.rel (0) target = $region29
    $region28: #{_lambda_.2} parent=1 // pred_region
      %224 = dma.done [#allocation4], 16
    $region29: #{_lambda_.2} parent=1 // pred_fallthru
      _
    // Predicated region
    $region30: #{_lambda_.2} parent=1 // pred_check
      _
    $region31: #{_lambda_.2} parent=1 // pred_check_branch
      %226 = sbr.rel (0) target = $region33
    $region32: #{_lambda_.2} parent=1 // pred_region
      %228 = dma.done [#allocation3], 16
    $region33: #{_lambda_.2} parent=1 // pred_fallthru
      _
    // Predicated region
    $region34: #{_lambda_.2} parent=1 // pred_check
      _
    $region35: #{_lambda_.2} parent=1 // pred_check_branch
      %230 = sbr.rel (0) target = $region37
    $region36: #{_lambda_.2} parent=1 // pred_region
      %232 = dma.done [#allocation7], 16
    $region37: #{_lambda_.2} parent=1 // pred_fallthru
      _
    %233 = sfence
    %234 = vsyncpa [#allocation3], 1
    %235 = vsyncpa [#allocation7], 1
    %236 = vsyncpa [#allocation4], 1

// kernel: _lambda_.3
$region0: #{_lambda_.3}
  #allocation0 [shape = 'u32[]', space=smem, size = 0x4, offset = 0x4, fixed_abs, tag = 'smem constant byte address 0x4 - core index']
  #allocation1 [shape = 'u32[72,128]{1,0:T(1,128)}', space=vmem, size = 0x9000, scoped, tag = 'internal scratch']
  #allocation2 [shape = 'f32[8,286]{1,0:T(8,128)}', space=vmem, size = 0x3000, scoped, tag = 'scratch operand']
  #allocation3 [shape = 'f32[1,1]{1,0:T(1,128)S(6)}', space=smem, size = 0x200, scoped, tag = 'scoped memory for _lambda_.3']
  %s0 = inlined_call_operand.<no memory space> [shape: f32[1,1], index: 0, kind: input, shape index: {}]
  %s1 = inlined_call_operand.vmem [shape: f32[9,4,8], index: 1, kind: input, shape index: {}]
  %s2 = inlined_call_operand.vmem [shape: f32[8,1], index: 2, kind: input, shape index: {}]
  %s3 = inlined_call_operand.vmem [shape: f32[2,4,324], index: 3, kind: input, shape index: {}]
  %s4 = inlined_call_operand.vmem [shape: f32[2,8,384], index: 4, kind: output, shape index: {}]
  %s5 = sld [smem:[#allocation0]]
  $region57: #{_lambda_.3} parent=0
    _
  %s7 = ssub.s32 1, %s5
  %s8 = scalar_select 0, %s7, %s5
  %9 = sst [smem:[#allocation3]] %s0
  loop: start=0, step=1, limit=4
  $region2: #{_lambda_.3} parent=0 // loop_pre_header
    _
  $region3: #{_lambda_.3} parent=0 // loop_header
    %s11 = sphi 0, %s15
    %p12 = scmp.ge.s32.totalorder %s11, 4
    %s18 = sphi 0, %s30
    %s19 = sphi 0, %s26
    %s20 = sphi 0, %s18
    %s21 = sphi 0, %s19
    %s22 = sphi 0, %s20
    %s23 = sphi 0, %s21
    %s31 = sphi 0, %s31
    %s33 = sphi 0, %s31
    %s34 = sphi 0, %s33
    %s48 = sphi 0, %s34
    %s54 = sphi 0, %s56
    %s57 = sphi 0, %s54
    %s58 = sphi 0, %s57
    %s74 = sphi 0, %s58
    %s78 = sphi 0, %s78
    %s80 = sphi 0, %s78
    %s81 = sphi 0, %s80
    %s95 = sphi 0, %s81
    %s103 = sphi 0, %s105
    %s106 = sphi 0, %s103
    %s107 = sphi 0, %s106
    %s123 = sphi 0, %s107
    %s129 = sphi 0, %s131
    %s132 = sphi 0, %s129
    %s133 = sphi 0, %s132
    %s149 = sphi 0, %s133
  $region4: #{_lambda_.3} parent=0 // loop_header_branch
    %14 = sbr.rel (%p12) target = $region8
  $region5: #{_lambda_.3} parent=0 // loop_body
    %s16 = ssub.s32 %s11, 1
    %s17 = ssub.s32 %s11, 2
    %s24 = sadd.s32 1, %s19
    %p25 = scmp.ge.s32.totalorder %s24, 1
    %s26 = scalar_select %p25, 0, %s24
    %s27 = sadd.s32 1, %s18
    %s28 = scalar_select %p25, %s27, %s18
    %p29 = scmp.ge.s32.totalorder %s28, 2
    %s30 = scalar_select %p29, 0, %s28
    %s32 = sadd.s32 %s31, 1
    %p35 = scmp.eq.s32.totalorder %s11, 1
    %p36 = scmp.ne.s32.totalorder %s31, %s33
    %p37 = scmp.eq.s32.totalorder %s11, 0
    %p38 = por %p36, %p37
    %p39 = scmp.ne.s32.totalorder %s31, %s33
    %p40 = scmp.eq.s32.totalorder %s16, 1
    %p41 = por %p39, %p40
    %p42 = scmp.ne.s32.totalorder %s33, %s34
    %p43 = scmp.eq.s32.totalorder %s16, 0
    %p44 = por %p42, %p43
    %p45 = scmp.ne.s32.totalorder %s33, %s34
    %p46 = scmp.eq.s32.totalorder %s17, 1
    %p47 = por %p45, %p46
    %p49 = scmp.ne.s32.totalorder %s34, %s48
    %p50 = scmp.eq.s32.totalorder %s17, 0
    %p51 = por %p49, %p50
    %s52 = ssub.s32 %s19, %s26
    %p53 = scmp.eq.s32.totalorder %s52, 0
    %s55 = sadd.s32 %s54, 1
    %s56 = scalar_select %p53, %s54, %s55
    %p59 = pneg %p53
    %p60 = scmp.eq.s32.totalorder %s11, 1
    %p61 = por %p59, %p60
    %p62 = scmp.ne.s32.totalorder %s54, %s57
    %p63 = scmp.eq.s32.totalorder %s11, 0
    %p64 = por %p62, %p63
    %p65 = scmp.ne.s32.totalorder %s54, %s57
    %p66 = scmp.eq.s32.totalorder %s16, 1
    %p67 = por %p65, %p66
    %p68 = scmp.ne.s32.totalorder %s57, %s58
    %p69 = scmp.eq.s32.totalorder %s16, 0
    %p70 = por %p68, %p69
    %p71 = scmp.ne.s32.totalorder %s57, %s58
    %p72 = scmp.eq.s32.totalorder %s17, 1
    %p73 = por %p71, %p72
    %p75 = scmp.ne.s32.totalorder %s58, %s74
    %p76 = scmp.eq.s32.totalorder %s17, 0
    %p77 = por %p75, %p76
    %s79 = sadd.s32 %s78, 1
    %p82 = scmp.eq.s32.totalorder %s11, 1
    %p83 = scmp.ne.s32.totalorder %s78, %s80
    %p84 = scmp.eq.s32.totalorder %s11, 0
    %p85 = por %p83, %p84
    %p86 = scmp.ne.s32.totalorder %s78, %s80
    %p87 = scmp.eq.s32.totalorder %s16, 1
    %p88 = por %p86, %p87
    %p89 = scmp.ne.s32.totalorder %s80, %s81
    %p90 = scmp.eq.s32.totalorder %s16, 0
    %p91 = por %p89, %p90
    %p92 = scmp.ne.s32.totalorder %s80, %s81
    %p93 = scmp.eq.s32.totalorder %s17, 1
    %p94 = por %p92, %p93
    %p96 = scmp.ne.s32.totalorder %s81, %s95
    %p97 = scmp.eq.s32.totalorder %s17, 0
    %p98 = por %p96, %p97
    %s99 = ssub.s32 %s18, %s30
    %s100 = ssub.s32 %s19, %s26
    %s101 = sor.u32 %s99, %s100
    %p102 = scmp.eq.s32.totalorder %s101, 0
    %s104 = sadd.s32 %s103, 1
    %s105 = scalar_select %p102, %s103, %s104
    %p108 = pneg %p102
    %p109 = scmp.eq.s32.totalorder %s11, 1
    %p110 = por %p108, %p109
    %p111 = scmp.ne.s32.totalorder %s103, %s106
    %p112 = scmp.eq.s32.totalorder %s11, 0
    %p113 = por %p111, %p112
    %p114 = scmp.ne.s32.totalorder %s103, %s106
    %p115 = scmp.eq.s32.totalorder %s16, 1
    %p116 = por %p114, %p115
    %p117 = scmp.ne.s32.totalorder %s106, %s107
    %p118 = scmp.eq.s32.totalorder %s16, 0
    %p119 = por %p117, %p118
    %p120 = scmp.ne.s32.totalorder %s106, %s107
    %p121 = scmp.eq.s32.totalorder %s17, 1
    %p122 = por %p120, %p121
    %p124 = scmp.ne.s32.totalorder %s107, %s123
    %p125 = scmp.eq.s32.totalorder %s17, 0
    %p126 = por %p124, %p125
    %s127 = ssub.s32 %s18, %s30
    %p128 = scmp.eq.s32.totalorder %s127, 0
    %s130 = sadd.s32 %s129, 1
    %s131 = scalar_select %p128, %s129, %s130
    %p134 = pneg %p128
    %p135 = scmp.eq.s32.totalorder %s11, 1
    %p136 = por %p134, %p135
    %p137 = scmp.ne.s32.totalorder %s129, %s132
    %p138 = scmp.eq.s32.totalorder %s11, 0
    %p139 = por %p137, %p138
    %p140 = scmp.ne.s32.totalorder %s129, %s132
    %p141 = scmp.eq.s32.totalorder %s16, 1
    %p142 = por %p140, %p141
    %p143 = scmp.ne.s32.totalorder %s132, %s133
    %p144 = scmp.eq.s32.totalorder %s16, 0
    %p145 = por %p143, %p144
    %p146 = scmp.ne.s32.totalorder %s132, %s133
    %p147 = scmp.eq.s32.totalorder %s17, 1
    %p148 = por %p146, %p147
    %p150 = scmp.ne.s32.totalorder %s133, %s149
    %p151 = scmp.eq.s32.totalorder %s17, 0
    %p152 = por %p150, %p151
    %p153 = scmp.le.s32.totalorder 1, %s11
    %p154 = scmp.lt.s32.totalorder %s11, 3
    %p155 = pnand %p153, %p154
    %p156 = pneg %p155
    // Predicated region
    $region9: #{_lambda_.3} parent=5 // pred_check
      _
    $region10: #{_lambda_.3} parent=5 // pred_check_branch
      %158 = sbr.rel (%p155) target = $region12
    $region11: #{_lambda_.3} parent=5 // pred_region
      %s159 = ssub.s32 %s11, 1
      // Predicated region
      $region13: #{_lambda_.3} parent=11 // pred_check
        %p160 = pneg %p44
      $region14: #{_lambda_.3} parent=11 // pred_check_branch
        %162 = sbr.rel (%p160) target = $region16
      $region15: #{_lambda_.3} parent=11 // pred_region
        _
      $region16: #{_lambda_.3} parent=11 // pred_fallthru
        _
      // Predicated region
      $region17: #{_lambda_.3} parent=11 // pred_check
        %p163 = pneg %p70
      $region18: #{_lambda_.3} parent=11 // pred_check_branch
        %165 = sbr.rel (%p163) target = $region20
      $region19: #{_lambda_.3} parent=11 // pred_region
        %p166 = scmp.lt.s32.totalorder %s21, 0
        %s167 = scalar_select %p166, %s21, 0
        %s168 = smul.addr %s167, 4
        %s169 = scalar_lea.vmem %s1, %s168
      $region20: #{_lambda_.3} parent=11 // pred_fallthru
        _
      // Predicated region
      $region21: #{_lambda_.3} parent=11 // pred_check
        %p170 = pneg %p91
      $region22: #{_lambda_.3} parent=11 // pred_check_branch
        %172 = sbr.rel (%p170) target = $region24
      $region23: #{_lambda_.3} parent=11 // pred_region
        _
      $region24: #{_lambda_.3} parent=11 // pred_fallthru
        _
    $region12: #{_lambda_.3} parent=5 // pred_fallthru
      _
    %p173 = scmp.lt.s32.totalorder %s11, 2
    // Predicated region
    $region25: #{_lambda_.3} parent=5 // pred_check
      %p174 = pneg %p173
    $region26: #{_lambda_.3} parent=5 // pred_check_branch
      %176 = sbr.rel (%p174) target = $region28
    $region27: #{_lambda_.3} parent=5 // pred_region
      // Predicated region
      $region29: #{_lambda_.3} parent=27 // pred_check
        %p177 = pneg %p113
      $region30: #{_lambda_.3} parent=27 // pred_check_branch
        %179 = sbr.rel (%p177) target = $region32
      $region31: #{_lambda_.3} parent=27 // pred_region
        %p180 = scmp.lt.s32.totalorder %s18, 1
        %s181 = scalar_select %p180, %s18, 1
        %p182 = scmp.lt.s32.totalorder %s19, 0
        %s183 = scalar_select %p182, %s19, 0
        %s184 = smul.addr %s183, 3
        %s185 = smul.addr %s181, 3
        %s186 = sadd.s32 %s184, %s185
        %s187 = smul.addr %s186, 4
        %s188 = scalar_lea.vmem %s3, %s187
      $region32: #{_lambda_.3} parent=27 // pred_fallthru
        _
    $region28: #{_lambda_.3} parent=5 // pred_fallthru
      _
    %p189 = scmp.le.s32.totalorder 1, %s11
    %p190 = scmp.lt.s32.totalorder %s11, 3
    %p191 = pnand %p189, %p190
    %p192 = pneg %p191
    // Predicated region
    $region33: #{_lambda_.3} parent=5 // pred_check
      _
    $region34: #{_lambda_.3} parent=5 // pred_check_branch
      %194 = sbr.rel (%p191) target = $region36
    $region35: #{_lambda_.3} parent=5 // pred_region
      %s195 = ssub.s32 %s11, 1
      %p196 = pneg %p44
      %p197 = pneg %p41
      %p198 = scmp.lt.s32.totalorder %s21, 0
      %s199 = scalar_select %p198, %s21, 0
      %s200 = smul.addr %s199, 4
      %s201 = scalar_lea.vmem %s1, %s200
      %p202 = pneg %p70
      %p203 = pneg %p67
      %p204 = pneg %p91
      %p205 = pneg %p88
      %p206 = scmp.lt.s32.totalorder %s20, 1
      %s207 = scalar_select %p206, %s20, 1
      %p208 = scmp.lt.s32.totalorder %s21, 0
      %s209 = scalar_select %p208, %s21, 0
      %s210 = smul.addr %s209, 3
      %s211 = smul.addr %s207, 3
      %s212 = sadd.s32 %s210, %s211
      %s213 = smul.addr %s212, 4
      %s214 = scalar_lea.vmem %s3, %s213
      %p215 = pneg %p119
      %p216 = pneg %p116
      %p217 = pneg %p145
      %p218 = pneg %p142
      %p219 = scmp.lt.s32.totalorder %s20, 1
      %s220 = scalar_select %p219, %s20, 1
      %s221 = smul.addr %s220, 3
      %s222 = smul.addr %s221, 8
      %s223 = scalar_lea.vmem %s4, %s222
      %p224 = scmp.lt.s32.totalorder %s21, 0
      %s225 = scalar_select %p224, %s21, 0
      %s226 = smul.addr %s225, 4
      %s227 = scalar_lea.vmem %s1, %s226
      %p228 = scmp.lt.s32.totalorder %s20, 1
      %s229 = scalar_select %p228, %s20, 1
      %p230 = scmp.lt.s32.totalorder %s21, 0
      %s231 = scalar_select %p230, %s21, 0
      %s232 = smul.addr %s231, 3
      %s233 = smul.addr %s229, 3
      %s234 = sadd.s32 %s232, %s233
      %s235 = smul.addr %s234, 4
      %s236 = scalar_lea.vmem %s3, %s235
      %p237 = scmp.lt.s32.totalorder %s20, 1
      %s238 = scalar_select %p237, %s20, 1
      %s239 = smul.addr %s238, 3
      %s240 = smul.addr %s239, 8
      %s241 = scalar_lea.vmem %s4, %s240
      %p242 = scmp.eq.s32.totalorder %s21, 0
      // Predicated region
      $region37: #{_lambda_.3} parent=35 // pred_check
        %p243 = pneg %p242
      $region38: #{_lambda_.3} parent=35 // pred_check_branch
        %245 = sbr.rel (%p243) target = $region40
      $region39: #{_lambda_.3} parent=35 // pred_region
        %246 = vst [vmem:[#allocation2] sm:$0xff] 0.0
        %247 = vst [vmem:[#allocation2 + $0x8] sm:$0xff] 0.0
        %vm248 = vcmask 244736
        %249 = vst.msk [vmem:[#allocation2 + $0x10] sm:$0xff] %vm248, 0.0
      $region40: #{_lambda_.3} parent=35 // pred_fallthru
        _
      %v250 = vld [vmem:[%s236] sm:$0xff]
      %v251 = vld [vmem:[%s236 + $0x8] sm:$0xf]
      %v252 = vld [vmem:[%s227] sm:$0xf]
      %s253 = scalar_lea.vmem %s227, 4
      %v254 = vld [vmem:[%s253] sm:$0xf]
      %255 = vxpose.xlu0.b32.start [1/16] %v254, 128
      %256 = vxpose.xlu0.b32.cont [2/16] 0.0, 128
      %257 = vxpose.xlu0.b32.cont [3/16] 0.0, 128
      %258 = vxpose.xlu0.b32.cont [4/16] 0.0, 128
      %259 = vxpose.xlu0.b32.cont [5/16] 0.0, 128
      %260 = vxpose.xlu0.b32.cont [6/16] 0.0, 128
      %261 = vxpose.xlu0.b32.cont [7/16] 0.0, 128
      %262 = vxpose.xlu0.b32.cont [8/16] 0.0, 128
      %263 = vxpose.xlu0.b32.cont [9/16] 0.0, 128
      %264 = vxpose.xlu0.b32.cont [10/16] 0.0, 128
      %265 = vxpose.xlu0.b32.cont [11/16] 0.0, 128
      %266 = vxpose.xlu0.b32.cont [12/16] 0.0, 128
      %267 = vxpose.xlu0.b32.cont [13/16] 0.0, 128
      %268 = vxpose.xlu0.b32.cont [14/16] 0.0, 128
      %269 = vxpose.xlu0.b32.cont [15/16] 0.0, 128
      %270 = vxpose.xlu0.b32.end [16/16] 0.0, 128
      %v271 = vpop.trf.xlu0
      %v272 = vpop.trf.xlu0
      %v273 = vpop.trf.xlu0
      %v274 = vpop.trf.xlu0
      %v275 = vpop.trf.xlu0
      %v276 = vpop.trf.xlu0
      %v277 = vpop.trf.xlu0
      %v278 = vpop.trf.xlu0
      %v279 = vpop.trf.xlu0
      %v280 = vpop.trf.xlu0
      %v281 = vpop.trf.xlu0
      %v282 = vpop.trf.xlu0
      %v283 = vpop.trf.xlu0
      %v284 = vpop.trf.xlu0
      %v285 = vpop.trf.xlu0
      %v286 = vpop.trf.xlu0
      %289 = vst [vmem:[#allocation1] ss:$2 sm:$0xff] %v250
      %s290 = scalar_lea.vmem [#allocation1], 16
      %291 = vst [vmem:[%s290] ss:$2 sm:$0xff] %v251
      %v292 = vld.sshfl [vmem:[#allocation1] sm:$0xff pattern:$0x75316420]
      %v293 = vld.sshfl [vmem:[#allocation1 + $0x8] sm:$0xff pattern:$0x75316420]
      %v294 = vld.sshfl [vmem:[#allocation1 + $0x10] sm:$0xff pattern:$0x75316420]
      %295 = vrot.lane.b32.xlu0 %v292, 127
      %v296 = vpop.permute.xlu0 %295
      %297 = vrot.lane.b32.xlu0 %v293, 127
      %v298 = vpop.permute.xlu0 %297
      %299 = vrot.lane.b32.xlu0 %v294, 127
      %v300 = vpop.permute.xlu0 %299
      %vm301 = vcmask 1039360
      %v302 = vsel %vm301, %v296, %v298
      %v303 = vsel %vm301, %v298, %v300
      %vm304 = vcmask 31744
      %v306 = vsel %vm304, %v271, 0
      %vm308 = vcmask 1043456
      %v309 = vsel %vm308, %v302, 0
      %v311 = vsel %vm308, %v303, 0
      %v313 = vsel %vm308, %v300, 0
      %315 = vmatpush.msra.mxu0 0.0
      %316 = vmatpush.msra.mxu0 0.0
      %317 = vmatpush.msra.mxu0 0.0
      %318 = vmatpush.msra.mxu0 0.0
      %319 = vmatpush.msra.mxu0 0.0
      %320 = vmatpush.msra.mxu0 0.0
      %321 = vmatpush.msra.mxu0 0.0
      %322 = vmatpush.msra.mxu0 0.0
      %323 = vmatpush.msra.mxu0 0.0
      %324 = vmatpush.msra.mxu0 0.0
      %325 = vmatpush.msra.mxu0 0.0
      %326 = vmatpush.msra.mxu0 0.0
      %327 = vmatpush.msra.mxu0 0.0
      %328 = vmatpush.msra.mxu0 0.0
      %329 = vmatpush.msra.mxu0 0.0
      %330 = vmatpush.msra.mxu0 %v309
      %331 = vmatmul.f32.gmra.mxu0 %v306
      %v332 = vpop.f32.mrf.mxu0
      %v333 = vadd.f32 0.0, %v332
      %334 = vdwg.mxu0
      %335 = vmatpush.msra.mxu0 0.0
      %336 = vmatpush.msra.mxu0 0.0
      %337 = vmatpush.msra.mxu0 0.0
      %338 = vmatpush.msra.mxu0 0.0
      %339 = vmatpush.msra.mxu0 0.0
      %340 = vmatpush.msra.mxu0 0.0
      %341 = vmatpush.msra.mxu0 0.0
      %342 = vmatpush.msra.mxu0 0.0
      %343 = vmatpush.msra.mxu0 0.0
      %344 = vmatpush.msra.mxu0 0.0
      %345 = vmatpush.msra.mxu0 0.0
      %346 = vmatpush.msra.mxu0 0.0
      %347 = vmatpush.msra.mxu0 0.0
      %348 = vmatpush.msra.mxu0 0.0
      %349 = vmatpush.msra.mxu0 0.0
      %350 = vmatpush.msra.mxu0 %v311
      %351 = vmatmul.f32.gmra.mxu0 %v306
      %v352 = vpop.f32.mrf.mxu0
      %v353 = vadd.f32 0.0, %v352
      %354 = vdwg.mxu0
      %355 = vmatpush.msra.mxu0 0.0
      %356 = vmatpush.msra.mxu0 0.0
      %357 = vmatpush.msra.mxu0 0.0
      %358 = vmatpush.msra.mxu0 0.0
      %359 = vmatpush.msra.mxu0 0.0
      %360 = vmatpush.msra.mxu0 0.0
      %361 = vmatpush.msra.mxu0 0.0
      %362 = vmatpush.msra.mxu0 0.0
      %363 = vmatpush.msra.mxu0 0.0
      %364 = vmatpush.msra.mxu0 0.0
      %365 = vmatpush.msra.mxu0 0.0
      %366 = vmatpush.msra.mxu0 0.0
      %367 = vmatpush.msra.mxu0 0.0
      %368 = vmatpush.msra.mxu0 0.0
      %369 = vmatpush.msra.mxu0 0.0
      %370 = vmatpush.msra.mxu0 %v313
      %371 = vmatmul.f32.gmra.mxu0 %v306
      %v372 = vpop.f32.mrf.mxu0
      %v373 = vadd.f32 0.0, %v372
      %374 = vdwg.mxu0
      %375 = vxpose.xlu0.b32.start [1/16] %v252, 128
      %376 = vxpose.xlu0.b32.cont [2/16] 0.0, 128
      %377 = vxpose.xlu0.b32.cont [3/16] 0.0, 128
      %378 = vxpose.xlu0.b32.cont [4/16] 0.0, 128
      %379 = vxpose.xlu0.b32.cont [5/16] 0.0, 128
      %380 = vxpose.xlu0.b32.cont [6/16] 0.0, 128
      %381 = vxpose.xlu0.b32.cont [7/16] 0.0, 128
      %382 = vxpose.xlu0.b32.cont [8/16] 0.0, 128
      %383 = vxpose.xlu0.b32.cont [9/16] 0.0, 128
      %384 = vxpose.xlu0.b32.cont [10/16] 0.0, 128
      %385 = vxpose.xlu0.b32.cont [11/16] 0.0, 128
      %386 = vxpose.xlu0.b32.cont [12/16] 0.0, 128
      %387 = vxpose.xlu0.b32.cont [13/16] 0.0, 128
      %388 = vxpose.xlu0.b32.cont [14/16] 0.0, 128
      %389 = vxpose.xlu0.b32.cont [15/16] 0.0, 128
      %390 = vxpose.xlu0.b32.end [16/16] 0.0, 128
      %v391 = vpop.trf.xlu0
      %v392 = vpop.trf.xlu0
      %v393 = vpop.trf.xlu0
      %v394 = vpop.trf.xlu0
      %v395 = vpop.trf.xlu0
      %v396 = vpop.trf.xlu0
      %v397 = vpop.trf.xlu0
      %v398 = vpop.trf.xlu0
      %v399 = vpop.trf.xlu0
      %v400 = vpop.trf.xlu0
      %v401 = vpop.trf.xlu0
      %v402 = vpop.trf.xlu0
      %v403 = vpop.trf.xlu0
      %v404 = vpop.trf.xlu0
      %v405 = vpop.trf.xlu0
      %v406 = vpop.trf.xlu0
      %407 = vst [vmem:[#allocation1] ss:$2 sm:$0xff] %v250
      %s408 = scalar_lea.vmem [#allocation1], 16
      %409 = vst [vmem:[%s408] ss:$2 sm:$0xff] %v251
      %v410 = vld.sshfl [vmem:[#allocation1] sm:$0xff pattern:$0x75316420]
      %v411 = vld.sshfl [vmem:[#allocation1 + $0x8] sm:$0xff pattern:$0x75316420]
      %v412 = vld.sshfl [vmem:[#allocation1 + $0x10] sm:$0xff pattern:$0x75316420]
      %v414 = vsel %vm304, %v391, 0
      %v416 = vsel %vm308, %v410, 0
      %v418 = vsel %vm308, %v411, 0
      %v420 = vsel %vm308, %v412, 0
      %422 = vmatpush.msra.mxu0 0.0
      %423 = vmatpush.msra.mxu0 0.0
      %424 = vmatpush.msra.mxu0 0.0
      %425 = vmatpush.msra.mxu0 0.0
      %426 = vmatpush.msra.mxu0 0.0
      %427 = vmatpush.msra.mxu0 0.0
      %428 = vmatpush.msra.mxu0 0.0
      %429 = vmatpush.msra.mxu0 0.0
      %430 = vmatpush.msra.mxu0 0.0
      %431 = vmatpush.msra.mxu0 0.0
      %432 = vmatpush.msra.mxu0 0.0
      %433 = vmatpush.msra.mxu0 0.0
      %434 = vmatpush.msra.mxu0 0.0
      %435 = vmatpush.msra.mxu0 0.0
      %436 = vmatpush.msra.mxu0 0.0
      %437 = vmatpush.msra.mxu0 %v416
      %438 = vmatmul.f32.gmra.mxu0 %v414
      %v439 = vpop.f32.mrf.mxu0
      %v440 = vadd.f32 %v333, %v439
      %441 = vdwg.mxu0
      %442 = vmatpush.msra.mxu0 0.0
      %443 = vmatpush.msra.mxu0 0.0
      %444 = vmatpush.msra.mxu0 0.0
      %445 = vmatpush.msra.mxu0 0.0
      %446 = vmatpush.msra.mxu0 0.0
      %447 = vmatpush.msra.mxu0 0.0
      %448 = vmatpush.msra.mxu0 0.0
      %449 = vmatpush.msra.mxu0 0.0
      %450 = vmatpush.msra.mxu0 0.0
      %451 = vmatpush.msra.mxu0 0.0
      %452 = vmatpush.msra.mxu0 0.0
      %453 = vmatpush.msra.mxu0 0.0
      %454 = vmatpush.msra.mxu0 0.0
      %455 = vmatpush.msra.mxu0 0.0
      %456 = vmatpush.msra.mxu0 0.0
      %457 = vmatpush.msra.mxu0 %v418
      %458 = vmatmul.f32.gmra.mxu0 %v414
      %v459 = vpop.f32.mrf.mxu0
      %v460 = vadd.f32 %v353, %v459
      %461 = vdwg.mxu0
      %462 = vmatpush.msra.mxu0 0.0
      %463 = vmatpush.msra.mxu0 0.0
      %464 = vmatpush.msra.mxu0 0.0
      %465 = vmatpush.msra.mxu0 0.0
      %466 = vmatpush.msra.mxu0 0.0
      %467 = vmatpush.msra.mxu0 0.0
      %468 = vmatpush.msra.mxu0 0.0
      %469 = vmatpush.msra.mxu0 0.0
      %470 = vmatpush.msra.mxu0 0.0
      %471 = vmatpush.msra.mxu0 0.0
      %472 = vmatpush.msra.mxu0 0.0
      %473 = vmatpush.msra.mxu0 0.0
      %474 = vmatpush.msra.mxu0 0.0
      %475 = vmatpush.msra.mxu0 0.0
      %476 = vmatpush.msra.mxu0 0.0
      %477 = vmatpush.msra.mxu0 %v420
      %478 = vmatmul.f32.gmra.mxu0 %v414
      %v479 = vpop.f32.mrf.mxu0
      %v480 = vadd.f32 %v373, %v479
      %481 = vdwg.mxu0
      %v482 = vld [vmem:[%s236] sm:$0xff]
      %v483 = vld [vmem:[%s236 + $0x8] sm:$0xf]
      %s484 = scalar_lea.vmem %s227, 8
      %v485 = vld [vmem:[%s484] sm:$0xf]
      %486 = vxpose.xlu0.b32.start [1/16] %v485, 128
      %487 = vxpose.xlu0.b32.cont [2/16] 0.0, 128
      %488 = vxpose.xlu0.b32.cont [3/16] 0.0, 128
      %489 = vxpose.xlu0.b32.cont [4/16] 0.0, 128
      %490 = vxpose.xlu0.b32.cont [5/16] 0.0, 128
      %491 = vxpose.xlu0.b32.cont [6/16] 0.0, 128
      %492 = vxpose.xlu0.b32.cont [7/16] 0.0, 128
      %493 = vxpose.xlu0.b32.cont [8/16] 0.0, 128
      %494 = vxpose.xlu0.b32.cont [9/16] 0.0, 128
      %495 = vxpose.xlu0.b32.cont [10/16] 0.0, 128
      %496 = vxpose.xlu0.b32.cont [11/16] 0.0, 128
      %497 = vxpose.xlu0.b32.cont [12/16] 0.0, 128
      %498 = vxpose.xlu0.b32.cont [13/16] 0.0, 128
      %499 = vxpose.xlu0.b32.cont [14/16] 0.0, 128
      %500 = vxpose.xlu0.b32.cont [15/16] 0.0, 128
      %501 = vxpose.xlu0.b32.end [16/16] 0.0, 128
      %v502 = vpop.trf.xlu0
      %v503 = vpop.trf.xlu0
      %v504 = vpop.trf.xlu0
      %v505 = vpop.trf.xlu0
      %v506 = vpop.trf.xlu0
      %v507 = vpop.trf.xlu0
      %v508 = vpop.trf.xlu0
      %v509 = vpop.trf.xlu0
      %v510 = vpop.trf.xlu0
      %v511 = vpop.trf.xlu0
      %v512 = vpop.trf.xlu0
      %v513 = vpop.trf.xlu0
      %v514 = vpop.trf.xlu0
      %v515 = vpop.trf.xlu0
      %v516 = vpop.trf.xlu0
      %v517 = vpop.trf.xlu0
      %520 = vst [vmem:[#allocation1] ss:$2 sm:$0xff] %v482
      %s521 = scalar_lea.vmem [#allocation1], 16
      %522 = vst [vmem:[%s521] ss:$2 sm:$0xff] %v483
      %v523 = vld.sshfl [vmem:[#allocation1] sm:$0xff pattern:$0x75316420]
      %v524 = vld.sshfl [vmem:[#allocation1 + $0x8] sm:$0xff pattern:$0x75316420]
      %v525 = vld.sshfl [vmem:[#allocation1 + $0x10] sm:$0xff pattern:$0x75316420]
      %526 = vrot.lane.b32.xlu0 %v523, 126
      %v527 = vpop.permute.xlu0 %526
      %528 = vrot.lane.b32.xlu0 %v524, 126
      %v529 = vpop.permute.xlu0 %528
      %530 = vrot.lane.b32.xlu0 %v525, 126
      %v531 = vpop.permute.xlu0 %530
      %vm532 = vcmask 1031168
      %v533 = vsel %vm532, %v527, %v529
      %v534 = vsel %vm532, %v529, %v531
      %v536 = vsel %vm304, %v502, 0
      %v538 = vsel %vm308, %v533, 0
      %v540 = vsel %vm308, %v534, 0
      %v542 = vsel %vm308, %v531, 0
      %544 = vmatpush.msra.mxu0 0.0
      %545 = vmatpush.msra.mxu0 0.0
      %546 = vmatpush.msra.mxu0 0.0
      %547 = vmatpush.msra.mxu0 0.0
      %548 = vmatpush.msra.mxu0 0.0
      %549 = vmatpush.msra.mxu0 0.0
      %550 = vmatpush.msra.mxu0 0.0
      %551 = vmatpush.msra.mxu0 0.0
      %552 = vmatpush.msra.mxu0 0.0
      %553 = vmatpush.msra.mxu0 0.0
      %554 = vmatpush.msra.mxu0 0.0
      %555 = vmatpush.msra.mxu0 0.0
      %556 = vmatpush.msra.mxu0 0.0
      %557 = vmatpush.msra.mxu0 0.0
      %558 = vmatpush.msra.mxu0 0.0
      %559 = vmatpush.msra.mxu0 %v538
      %560 = vmatmul.f32.gmra.mxu0 %v536
      %v561 = vpop.f32.mrf.mxu0
      %v562 = vadd.f32 0.0, %v561
      %563 = vdwg.mxu0
      %564 = vmatpush.msra.mxu0 0.0
      %565 = vmatpush.msra.mxu0 0.0
      %566 = vmatpush.msra.mxu0 0.0
      %567 = vmatpush.msra.mxu0 0.0
      %568 = vmatpush.msra.mxu0 0.0
      %569 = vmatpush.msra.mxu0 0.0
      %570 = vmatpush.msra.mxu0 0.0
      %571 = vmatpush.msra.mxu0 0.0
      %572 = vmatpush.msra.mxu0 0.0
      %573 = vmatpush.msra.mxu0 0.0
      %574 = vmatpush.msra.mxu0 0.0
      %575 = vmatpush.msra.mxu0 0.0
      %576 = vmatpush.msra.mxu0 0.0
      %577 = vmatpush.msra.mxu0 0.0
      %578 = vmatpush.msra.mxu0 0.0
      %579 = vmatpush.msra.mxu0 %v540
      %580 = vmatmul.f32.gmra.mxu0 %v536
      %v581 = vpop.f32.mrf.mxu0
      %v582 = vadd.f32 0.0, %v581
      %583 = vdwg.mxu0
      %584 = vmatpush.msra.mxu0 0.0
      %585 = vmatpush.msra.mxu0 0.0
      %586 = vmatpush.msra.mxu0 0.0
      %587 = vmatpush.msra.mxu0 0.0
      %588 = vmatpush.msra.mxu0 0.0
      %589 = vmatpush.msra.mxu0 0.0
      %590 = vmatpush.msra.mxu0 0.0
      %591 = vmatpush.msra.mxu0 0.0
      %592 = vmatpush.msra.mxu0 0.0
      %593 = vmatpush.msra.mxu0 0.0
      %594 = vmatpush.msra.mxu0 0.0
      %595 = vmatpush.msra.mxu0 0.0
      %596 = vmatpush.msra.mxu0 0.0
      %597 = vmatpush.msra.mxu0 0.0
      %598 = vmatpush.msra.mxu0 0.0
      %599 = vmatpush.msra.mxu0 %v542
      %600 = vmatmul.f32.gmra.mxu0 %v536
      %v601 = vpop.f32.mrf.mxu0
      %v602 = vadd.f32 0.0, %v601
      %603 = vdwg.mxu0
      %v604 = vadd.f32 %v440, %v562
      %v605 = vadd.f32 %v460, %v582
      %v606 = vadd.f32 %v480, %v602
      %v607 = vld [vmem:[%s236] sm:$0xff]
      %v608 = vld [vmem:[%s236 + $0x8] sm:$0xf]
      %s609 = scalar_lea.vmem %s227, 12
      %v610 = vld [vmem:[%s609] sm:$0xf]
      %611 = vxpose.xlu0.b32.start [1/16] %v610, 128
      %612 = vxpose.xlu0.b32.cont [2/16] 0.0, 128
      %613 = vxpose.xlu0.b32.cont [3/16] 0.0, 128
      %614 = vxpose.xlu0.b32.cont [4/16] 0.0, 128
      %615 = vxpose.xlu0.b32.cont [5/16] 0.0, 128
      %616 = vxpose.xlu0.b32.cont [6/16] 0.0, 128
      %617 = vxpose.xlu0.b32.cont [7/16] 0.0, 128
      %618 = vxpose.xlu0.b32.cont [8/16] 0.0, 128
      %619 = vxpose.xlu0.b32.cont [9/16] 0.0, 128
      %620 = vxpose.xlu0.b32.cont [10/16] 0.0, 128
      %621 = vxpose.xlu0.b32.cont [11/16] 0.0, 128
      %622 = vxpose.xlu0.b32.cont [12/16] 0.0, 128
      %623 = vxpose.xlu0.b32.cont [13/16] 0.0, 128
      %624 = vxpose.xlu0.b32.cont [14/16] 0.0, 128
      %625 = vxpose.xlu0.b32.cont [15/16] 0.0, 128
      %626 = vxpose.xlu0.b32.end [16/16] 0.0, 128
      %v627 = vpop.trf.xlu0
      %v628 = vpop.trf.xlu0
      %v629 = vpop.trf.xlu0
      %v630 = vpop.trf.xlu0
      %v631 = vpop.trf.xlu0
      %v632 = vpop.trf.xlu0
      %v633 = vpop.trf.xlu0
      %v634 = vpop.trf.xlu0
      %v635 = vpop.trf.xlu0
      %v636 = vpop.trf.xlu0
      %v637 = vpop.trf.xlu0
      %v638 = vpop.trf.xlu0
      %v639 = vpop.trf.xlu0
      %v640 = vpop.trf.xlu0
      %v641 = vpop.trf.xlu0
      %v642 = vpop.trf.xlu0
      %645 = vst [vmem:[#allocation1] ss:$2 sm:$0xff] %v607
      %s646 = scalar_lea.vmem [#allocation1], 16
      %647 = vst [vmem:[%s646] ss:$2 sm:$0xff] %v608
      %v648 = vld.sshfl [vmem:[#allocation1] sm:$0xff pattern:$0x75316420]
      %v649 = vld.sshfl [vmem:[#allocation1 + $0x8] sm:$0xff pattern:$0x75316420]
      %v650 = vld.sshfl [vmem:[#allocation1 + $0x10] sm:$0xff pattern:$0x75316420]
      %651 = vrot.lane.b32.xlu0 %v648, 110
      %v652 = vpop.permute.xlu0 %651
      %653 = vrot.lane.b32.xlu0 %v649, 110
      %v654 = vpop.permute.xlu0 %653
      %655 = vrot.lane.b32.xlu0 %v650, 110
      %v656 = vpop.permute.xlu0 %655
      %vm657 = vcmask 900096
      %v658 = vsel %vm657, %v652, %v654
      %v659 = vsel %vm657, %v654, %v656
      %v661 = vsel %vm304, %v627, 0
      %v663 = vsel %vm308, %v658, 0
      %v665 = vsel %vm308, %v659, 0
      %v667 = vsel %vm308, %v656, 0
      %669 = vmatpush.msra.mxu0 0.0
      %670 = vmatpush.msra.mxu0 0.0
      %671 = vmatpush.msra.mxu0 0.0
      %672 = vmatpush.msra.mxu0 0.0
      %673 = vmatpush.msra.mxu0 0.0
      %674 = vmatpush.msra.mxu0 0.0
      %675 = vmatpush.msra.mxu0 0.0
      %676 = vmatpush.msra.mxu0 0.0
      %677 = vmatpush.msra.mxu0 0.0
      %678 = vmatpush.msra.mxu0 0.0
      %679 = vmatpush.msra.mxu0 0.0
      %680 = vmatpush.msra.mxu0 0.0
      %681 = vmatpush.msra.mxu0 0.0
      %682 = vmatpush.msra.mxu0 0.0
      %683 = vmatpush.msra.mxu0 0.0
      %684 = vmatpush.msra.mxu0 %v663
      %685 = vmatmul.f32.gmra.mxu0 %v661
      %v686 = vpop.f32.mrf.mxu0
      %v687 = vadd.f32 0.0, %v686
      %688 = vdwg.mxu0
      %689 = vmatpush.msra.mxu0 0.0
      %690 = vmatpush.msra.mxu0 0.0
      %691 = vmatpush.msra.mxu0 0.0
      %692 = vmatpush.msra.mxu0 0.0
      %693 = vmatpush.msra.mxu0 0.0
      %694 = vmatpush.msra.mxu0 0.0
      %695 = vmatpush.msra.mxu0 0.0
      %696 = vmatpush.msra.mxu0 0.0
      %697 = vmatpush.msra.mxu0 0.0
      %698 = vmatpush.msra.mxu0 0.0
      %699 = vmatpush.msra.mxu0 0.0
      %700 = vmatpush.msra.mxu0 0.0
      %701 = vmatpush.msra.mxu0 0.0
      %702 = vmatpush.msra.mxu0 0.0
      %703 = vmatpush.msra.mxu0 0.0
      %704 = vmatpush.msra.mxu0 %v665
      %705 = vmatmul.f32.gmra.mxu0 %v661
      %v706 = vpop.f32.mrf.mxu0
      %v707 = vadd.f32 0.0, %v706
      %708 = vdwg.mxu0
      %709 = vmatpush.msra.mxu0 0.0
      %710 = vmatpush.msra.mxu0 0.0
      %711 = vmatpush.msra.mxu0 0.0
      %712 = vmatpush.msra.mxu0 0.0
      %713 = vmatpush.msra.mxu0 0.0
      %714 = vmatpush.msra.mxu0 0.0
      %715 = vmatpush.msra.mxu0 0.0
      %716 = vmatpush.msra.mxu0 0.0
      %717 = vmatpush.msra.mxu0 0.0
      %718 = vmatpush.msra.mxu0 0.0
      %719 = vmatpush.msra.mxu0 0.0
      %720 = vmatpush.msra.mxu0 0.0
      %721 = vmatpush.msra.mxu0 0.0
      %722 = vmatpush.msra.mxu0 0.0
      %723 = vmatpush.msra.mxu0 0.0
      %724 = vmatpush.msra.mxu0 %v667
      %725 = vmatmul.f32.gmra.mxu0 %v661
      %v726 = vpop.f32.mrf.mxu0
      %v727 = vadd.f32 0.0, %v726
      %728 = vdwg.mxu0
      %v729 = vadd.f32 %v604, %v687
      %v730 = vadd.f32 %v605, %v707
      %v731 = vadd.f32 %v606, %v727
      %v732 = vld [vmem:[%s236] sm:$0xff]
      %v733 = vld [vmem:[%s236 + $0x8] sm:$0xf]
      %s734 = scalar_lea.vmem %s227, 16
      %v735 = vld [vmem:[%s734] sm:$0xf]
      %736 = vxpose.xlu0.b32.start [1/16] %v735, 128
      %737 = vxpose.xlu0.b32.cont [2/16] 0.0, 128
      %738 = vxpose.xlu0.b32.cont [3/16] 0.0, 128
      %739 = vxpose.xlu0.b32.cont [4/16] 0.0, 128
      %740 = vxpose.xlu0.b32.cont [5/16] 0.0, 128
      %741 = vxpose.xlu0.b32.cont [6/16] 0.0, 128
      %742 = vxpose.xlu0.b32.cont [7/16] 0.0, 128
      %743 = vxpose.xlu0.b32.cont [8/16] 0.0, 128
      %744 = vxpose.xlu0.b32.cont [9/16] 0.0, 128
      %745 = vxpose.xlu0.b32.cont [10/16] 0.0, 128
      %746 = vxpose.xlu0.b32.cont [11/16] 0.0, 128
      %747 = vxpose.xlu0.b32.cont [12/16] 0.0, 128
      %748 = vxpose.xlu0.b32.cont [13/16] 0.0, 128
      %749 = vxpose.xlu0.b32.cont [14/16] 0.0, 128
      %750 = vxpose.xlu0.b32.cont [15/16] 0.0, 128
      %751 = vxpose.xlu0.b32.end [16/16] 0.0, 128
      %v752 = vpop.trf.xlu0
      %v753 = vpop.trf.xlu0
      %v754 = vpop.trf.xlu0
      %v755 = vpop.trf.xlu0
      %v756 = vpop.trf.xlu0
      %v757 = vpop.trf.xlu0
      %v758 = vpop.trf.xlu0
      %v759 = vpop.trf.xlu0
      %v760 = vpop.trf.xlu0
      %v761 = vpop.trf.xlu0
      %v762 = vpop.trf.xlu0
      %v763 = vpop.trf.xlu0
      %v764 = vpop.trf.xlu0
      %v765 = vpop.trf.xlu0
      %v766 = vpop.trf.xlu0
      %v767 = vpop.trf.xlu0
      %770 = vst [vmem:[#allocation1] ss:$2 sm:$0xff] %v732
      %s771 = scalar_lea.vmem [#allocation1], 16
      %772 = vst [vmem:[%s771] ss:$2 sm:$0xff] %v733
      %v773 = vld.sshfl [vmem:[#allocation1] sm:$0xff pattern:$0x75316420]
      %v774 = vld.sshfl [vmem:[#allocation1 + $0x8] sm:$0xff pattern:$0x75316420]
      %v775 = vld.sshfl [vmem:[#allocation1 + $0x10] sm:$0xff pattern:$0x75316420]
      %776 = vrot.lane.b32.xlu0 %v773, 109
      %v777 = vpop.permute.xlu0 %776
      %778 = vrot.lane.b32.xlu0 %v774, 109
      %v779 = vpop.permute.xlu0 %778
      %780 = vrot.lane.b32.xlu0 %v775, 109
      %v781 = vpop.permute.xlu0 %780
      %vm782 = vcmask 891904
      %v783 = vsel %vm782, %v777, %v779
      %v784 = vsel %vm782, %v779, %v781
      %v786 = vsel %vm304, %v752, 0
      %v788 = vsel %vm308, %v783, 0
      %v790 = vsel %vm308, %v784, 0
      %v792 = vsel %vm308, %v781, 0
      %794 = vmatpush.msra.mxu0 0.0
      %795 = vmatpush.msra.mxu0 0.0
      %796 = vmatpush.msra.mxu0 0.0
      %797 = vmatpush.msra.mxu0 0.0
      %798 = vmatpush.msra.mxu0 0.0
      %799 = vmatpush.msra.mxu0 0.0
      %800 = vmatpush.msra.mxu0 0.0
      %801 = vmatpush.msra.mxu0 0.0
      %802 = vmatpush.msra.mxu0 0.0
      %803 = vmatpush.msra.mxu0 0.0
      %804 = vmatpush.msra.mxu0 0.0
      %805 = vmatpush.msra.mxu0 0.0
      %806 = vmatpush.msra.mxu0 0.0
      %807 = vmatpush.msra.mxu0 0.0
      %808 = vmatpush.msra.mxu0 0.0
      %809 = vmatpush.msra.mxu0 %v788
      %810 = vmatmul.f32.gmra.mxu0 %v786
      %v811 = vpop.f32.mrf.mxu0
      %v812 = vadd.f32 0.0, %v811
      %813 = vdwg.mxu0
      %814 = vmatpush.msra.mxu0 0.0
      %815 = vmatpush.msra.mxu0 0.0
      %816 = vmatpush.msra.mxu0 0.0
      %817 = vmatpush.msra.mxu0 0.0
      %818 = vmatpush.msra.mxu0 0.0
      %819 = vmatpush.msra.mxu0 0.0
      %820 = vmatpush.msra.mxu0 0.0
      %821 = vmatpush.msra.mxu0 0.0
      %822 = vmatpush.msra.mxu0 0.0
      %823 = vmatpush.msra.mxu0 0.0
      %824 = vmatpush.msra.mxu0 0.0
      %825 = vmatpush.msra.mxu0 0.0
      %826 = vmatpush.msra.mxu0 0.0
      %827 = vmatpush.msra.mxu0 0.0
      %828 = vmatpush.msra.mxu0 0.0
      %829 = vmatpush.msra.mxu0 %v790
      %830 = vmatmul.f32.gmra.mxu0 %v786
      %v831 = vpop.f32.mrf.mxu0
      %v832 = vadd.f32 0.0, %v831
      %833 = vdwg.mxu0
      %834 = vmatpush.msra.mxu0 0.0
      %835 = vmatpush.msra.mxu0 0.0
      %836 = vmatpush.msra.mxu0 0.0
      %837 = vmatpush.msra.mxu0 0.0
      %838 = vmatpush.msra.mxu0 0.0
      %839 = vmatpush.msra.mxu0 0.0
      %840 = vmatpush.msra.mxu0 0.0
      %841 = vmatpush.msra.mxu0 0.0
      %842 = vmatpush.msra.mxu0 0.0
      %843 = vmatpush.msra.mxu0 0.0
      %844 = vmatpush.msra.mxu0 0.0
      %845 = vmatpush.msra.mxu0 0.0
      %846 = vmatpush.msra.mxu0 0.0
      %847 = vmatpush.msra.mxu0 0.0
      %848 = vmatpush.msra.mxu0 0.0
      %849 = vmatpush.msra.mxu0 %v792
      %850 = vmatmul.f32.gmra.mxu0 %v786
      %v851 = vpop.f32.mrf.mxu0
      %v852 = vadd.f32 0.0, %v851
      %853 = vdwg.mxu0
      %v854 = vadd.f32 %v729, %v812
      %v855 = vadd.f32 %v730, %v832
      %v856 = vadd.f32 %v731, %v852
      %v857 = vld [vmem:[%s236] sm:$0xff]
      %v858 = vld [vmem:[%s236 + $0x8] sm:$0xf]
      %s859 = scalar_lea.vmem %s227, 20
      %v860 = vld [vmem:[%s859] sm:$0xf]
      %861 = vxpose.xlu0.b32.start [1/16] %v860, 128
      %862 = vxpose.xlu0.b32.cont [2/16] 0.0, 128
      %863 = vxpose.xlu0.b32.cont [3/16] 0.0, 128
      %864 = vxpose.xlu0.b32.cont [4/16] 0.0, 128
      %865 = vxpose.xlu0.b32.cont [5/16] 0.0, 128
      %866 = vxpose.xlu0.b32.cont [6/16] 0.0, 128
      %867 = vxpose.xlu0.b32.cont [7/16] 0.0, 128
      %868 = vxpose.xlu0.b32.cont [8/16] 0.0, 128
      %869 = vxpose.xlu0.b32.cont [9/16] 0.0, 128
      %870 = vxpose.xlu0.b32.cont [10/16] 0.0, 128
      %871 = vxpose.xlu0.b32.cont [11/16] 0.0, 128
      %872 = vxpose.xlu0.b32.cont [12/16] 0.0, 128
      %873 = vxpose.xlu0.b32.cont [13/16] 0.0, 128
      %874 = vxpose.xlu0.b32.cont [14/16] 0.0, 128
      %875 = vxpose.xlu0.b32.cont [15/16] 0.0, 128
      %876 = vxpose.xlu0.b32.end [16/16] 0.0, 128
      %v877 = vpop.trf.xlu0
      %v878 = vpop.trf.xlu0
      %v879 = vpop.trf.xlu0
      %v880 = vpop.trf.xlu0
      %v881 = vpop.trf.xlu0
      %v882 = vpop.trf.xlu0
      %v883 = vpop.trf.xlu0
      %v884 = vpop.trf.xlu0
      %v885 = vpop.trf.xlu0
      %v886 = vpop.trf.xlu0
      %v887 = vpop.trf.xlu0
      %v888 = vpop.trf.xlu0
      %v889 = vpop.trf.xlu0
      %v890 = vpop.trf.xlu0
      %v891 = vpop.trf.xlu0
      %v892 = vpop.trf.xlu0
      %895 = vst [vmem:[#allocation1] ss:$2 sm:$0xff] %v857
      %s896 = scalar_lea.vmem [#allocation1], 16
      %897 = vst [vmem:[%s896] ss:$2 sm:$0xff] %v858
      %v898 = vld.sshfl [vmem:[#allocation1] sm:$0xff pattern:$0x75316420]
      %v899 = vld.sshfl [vmem:[#allocation1 + $0x8] sm:$0xff pattern:$0x75316420]
      %v900 = vld.sshfl [vmem:[#allocation1 + $0x10] sm:$0xff pattern:$0x75316420]
      %901 = vrot.lane.b32.xlu0 %v898, 108
      %v902 = vpop.permute.xlu0 %901
      %903 = vrot.lane.b32.xlu0 %v899, 108
      %v904 = vpop.permute.xlu0 %903
      %905 = vrot.lane.b32.xlu0 %v900, 108
      %v906 = vpop.permute.xlu0 %905
      %vm907 = vcmask 883712
      %v908 = vsel %vm907, %v902, %v904
      %v909 = vsel %vm907, %v904, %v906
      %v911 = vsel %vm304, %v877, 0
      %v913 = vsel %vm308, %v908, 0
      %v915 = vsel %vm308, %v909, 0
      %v917 = vsel %vm308, %v906, 0
      %919 = vmatpush.msra.mxu0 0.0
      %920 = vmatpush.msra.mxu0 0.0
      %921 = vmatpush.msra.mxu0 0.0
      %922 = vmatpush.msra.mxu0 0.0
      %923 = vmatpush.msra.mxu0 0.0
      %924 = vmatpush.msra.mxu0 0.0
      %925 = vmatpush.msra.mxu0 0.0
      %926 = vmatpush.msra.mxu0 0.0
      %927 = vmatpush.msra.mxu0 0.0
      %928 = vmatpush.msra.mxu0 0.0
      %929 = vmatpush.msra.mxu0 0.0
      %930 = vmatpush.msra.mxu0 0.0
      %931 = vmatpush.msra.mxu0 0.0
      %932 = vmatpush.msra.mxu0 0.0
      %933 = vmatpush.msra.mxu0 0.0
      %934 = vmatpush.msra.mxu0 %v913
      %935 = vmatmul.f32.gmra.mxu0 %v911
      %v936 = vpop.f32.mrf.mxu0
      %v937 = vadd.f32 0.0, %v936
      %938 = vdwg.mxu0
      %939 = vmatpush.msra.mxu0 0.0
      %940 = vmatpush.msra.mxu0 0.0
      %941 = vmatpush.msra.mxu0 0.0
      %942 = vmatpush.msra.mxu0 0.0
      %943 = vmatpush.msra.mxu0 0.0
      %944 = vmatpush.msra.mxu0 0.0
      %945 = vmatpush.msra.mxu0 0.0
      %946 = vmatpush.msra.mxu0 0.0
      %947 = vmatpush.msra.mxu0 0.0
      %948 = vmatpush.msra.mxu0 0.0
      %949 = vmatpush.msra.mxu0 0.0
      %950 = vmatpush.msra.mxu0 0.0
      %951 = vmatpush.msra.mxu0 0.0
      %952 = vmatpush.msra.mxu0 0.0
      %953 = vmatpush.msra.mxu0 0.0
      %954 = vmatpush.msra.mxu0 %v915
      %955 = vmatmul.f32.gmra.mxu0 %v911
      %v956 = vpop.f32.mrf.mxu0
      %v957 = vadd.f32 0.0, %v956
      %958 = vdwg.mxu0
      %959 = vmatpush.msra.mxu0 0.0
      %960 = vmatpush.msra.mxu0 0.0
      %961 = vmatpush.msra.mxu0 0.0
      %962 = vmatpush.msra.mxu0 0.0
      %963 = vmatpush.msra.mxu0 0.0
      %964 = vmatpush.msra.mxu0 0.0
      %965 = vmatpush.msra.mxu0 0.0
      %966 = vmatpush.msra.mxu0 0.0
      %967 = vmatpush.msra.mxu0 0.0
      %968 = vmatpush.msra.mxu0 0.0
      %969 = vmatpush.msra.mxu0 0.0
      %970 = vmatpush.msra.mxu0 0.0
      %971 = vmatpush.msra.mxu0 0.0
      %972 = vmatpush.msra.mxu0 0.0
      %973 = vmatpush.msra.mxu0 0.0
      %974 = vmatpush.msra.mxu0 %v917
      %975 = vmatmul.f32.gmra.mxu0 %v911
      %v976 = vpop.f32.mrf.mxu0
      %v977 = vadd.f32 0.0, %v976
      %978 = vdwg.mxu0
      %v979 = vadd.f32 %v854, %v937
      %v980 = vadd.f32 %v855, %v957
      %v981 = vadd.f32 %v856, %v977
      %v982 = vld [vmem:[%s236] sm:$0xff]
      %v983 = vld [vmem:[%s236 + $0x8] sm:$0xf]
      %s984 = scalar_lea.vmem %s227, 24
      %v985 = vld [vmem:[%s984] sm:$0xf]
      %986 = vxpose.xlu0.b32.start [1/16] %v985, 128
      %987 = vxpose.xlu0.b32.cont [2/16] 0.0, 128
      %988 = vxpose.xlu0.b32.cont [3/16] 0.0, 128
      %989 = vxpose.xlu0.b32.cont [4/16] 0.0, 128
      %990 = vxpose.xlu0.b32.cont [5/16] 0.0, 128
      %991 = vxpose.xlu0.b32.cont [6/16] 0.0, 128
      %992 = vxpose.xlu0.b32.cont [7/16] 0.0, 128
      %993 = vxpose.xlu0.b32.cont [8/16] 0.0, 128
      %994 = vxpose.xlu0.b32.cont [9/16] 0.0, 128
      %995 = vxpose.xlu0.b32.cont [10/16] 0.0, 128
      %996 = vxpose.xlu0.b32.cont [11/16] 0.0, 128
      %997 = vxpose.xlu0.b32.cont [12/16] 0.0, 128
      %998 = vxpose.xlu0.b32.cont [13/16] 0.0, 128
      %999 = vxpose.xlu0.b32.cont [14/16] 0.0, 128
      %1000 = vxpose.xlu0.b32.cont [15/16] 0.0, 128
      %1001 = vxpose.xlu0.b32.end [16/16] 0.0, 128
      %v1002 = vpop.trf.xlu0
      %v1003 = vpop.trf.xlu0
      %v1004 = vpop.trf.xlu0
      %v1005 = vpop.trf.xlu0
      %v1006 = vpop.trf.xlu0
      %v1007 = vpop.trf.xlu0
      %v1008 = vpop.trf.xlu0
      %v1009 = vpop.trf.xlu0
      %v1010 = vpop.trf.xlu0
      %v1011 = vpop.trf.xlu0
      %v1012 = vpop.trf.xlu0
      %v1013 = vpop.trf.xlu0
      %v1014 = vpop.trf.xlu0
      %v1015 = vpop.trf.xlu0
      %v1016 = vpop.trf.xlu0
      %v1017 = vpop.trf.xlu0
      %1020 = vst [vmem:[#allocation1] ss:$2 sm:$0xff] %v982
      %s1021 = scalar_lea.vmem [#allocation1], 16
      %1022 = vst [vmem:[%s1021] ss:$2 sm:$0xff] %v983
      %v1023 = vld.sshfl [vmem:[#allocation1] sm:$0xff pattern:$0x75316420]
      %v1024 = vld.sshfl [vmem:[#allocation1 + $0x8] sm:$0xff pattern:$0x75316420]
      %v1025 = vld.sshfl [vmem:[#allocation1 + $0x10] sm:$0xff pattern:$0x75316420]
      %1026 = vrot.lane.b32.xlu0 %v1023, 92
      %v1027 = vpop.permute.xlu0 %1026
      %1028 = vrot.lane.b32.xlu0 %v1024, 92
      %v1029 = vpop.permute.xlu0 %1028
      %1030 = vrot.lane.b32.xlu0 %v1025, 92
      %v1031 = vpop.permute.xlu0 %1030
      %vm1032 = vcmask 752640
      %v1033 = vsel %vm1032, %v1027, %v1029
      %v1034 = vsel %vm1032, %v1029, %v1031
      %v1036 = vsel %vm304, %v1002, 0
      %v1038 = vsel %vm308, %v1033, 0
      %v1040 = vsel %vm308, %v1034, 0
      %v1042 = vsel %vm308, %v1031, 0
      %1044 = vmatpush.msra.mxu0 0.0
      %1045 = vmatpush.msra.mxu0 0.0
      %1046 = vmatpush.msra.mxu0 0.0
      %1047 = vmatpush.msra.mxu0 0.0
      %1048 = vmatpush.msra.mxu0 0.0
      %1049 = vmatpush.msra.mxu0 0.0
      %1050 = vmatpush.msra.mxu0 0.0
      %1051 = vmatpush.msra.mxu0 0.0
      %1052 = vmatpush.msra.mxu0 0.0
      %1053 = vmatpush.msra.mxu0 0.0
      %1054 = vmatpush.msra.mxu0 0.0
      %1055 = vmatpush.msra.mxu0 0.0
      %1056 = vmatpush.msra.mxu0 0.0
      %1057 = vmatpush.msra.mxu0 0.0
      %1058 = vmatpush.msra.mxu0 0.0
      %1059 = vmatpush.msra.mxu0 %v1038
      %1060 = vmatmul.f32.gmra.mxu0 %v1036
      %v1061 = vpop.f32.mrf.mxu0
      %v1062 = vadd.f32 0.0, %v1061
      %1063 = vdwg.mxu0
      %1064 = vmatpush.msra.mxu0 0.0
      %1065 = vmatpush.msra.mxu0 0.0
      %1066 = vmatpush.msra.mxu0 0.0
      %1067 = vmatpush.msra.mxu0 0.0
      %1068 = vmatpush.msra.mxu0 0.0
      %1069 = vmatpush.msra.mxu0 0.0
      %1070 = vmatpush.msra.mxu0 0.0
      %1071 = vmatpush.msra.mxu0 0.0
      %1072 = vmatpush.msra.mxu0 0.0
      %1073 = vmatpush.msra.mxu0 0.0
      %1074 = vmatpush.msra.mxu0 0.0
      %1075 = vmatpush.msra.mxu0 0.0
      %1076 = vmatpush.msra.mxu0 0.0
      %1077 = vmatpush.msra.mxu0 0.0
      %1078 = vmatpush.msra.mxu0 0.0
      %1079 = vmatpush.msra.mxu0 %v1040
      %1080 = vmatmul.f32.gmra.mxu0 %v1036
      %v1081 = vpop.f32.mrf.mxu0
      %v1082 = vadd.f32 0.0, %v1081
      %1083 = vdwg.mxu0
      %1084 = vmatpush.msra.mxu0 0.0
      %1085 = vmatpush.msra.mxu0 0.0
      %1086 = vmatpush.msra.mxu0 0.0
      %1087 = vmatpush.msra.mxu0 0.0
      %1088 = vmatpush.msra.mxu0 0.0
      %1089 = vmatpush.msra.mxu0 0.0
      %1090 = vmatpush.msra.mxu0 0.0
      %1091 = vmatpush.msra.mxu0 0.0
      %1092 = vmatpush.msra.mxu0 0.0
      %1093 = vmatpush.msra.mxu0 0.0
      %1094 = vmatpush.msra.mxu0 0.0
      %1095 = vmatpush.msra.mxu0 0.0
      %1096 = vmatpush.msra.mxu0 0.0
      %1097 = vmatpush.msra.mxu0 0.0
      %1098 = vmatpush.msra.mxu0 0.0
      %1099 = vmatpush.msra.mxu0 %v1042
      %1100 = vmatmul.f32.gmra.mxu0 %v1036
      %v1101 = vpop.f32.mrf.mxu0
      %v1102 = vadd.f32 0.0, %v1101
      %1103 = vdwg.mxu0
      %v1104 = vadd.f32 %v979, %v1062
      %v1105 = vadd.f32 %v980, %v1082
      %v1106 = vadd.f32 %v981, %v1102
      %v1107 = vld [vmem:[%s236] sm:$0xff]
      %v1108 = vld [vmem:[%s236 + $0x8] sm:$0xf]
      %s1109 = scalar_lea.vmem %s227, 28
      %v1110 = vld [vmem:[%s1109] sm:$0xf]
      %1111 = vxpose.xlu0.b32.start [1/16] %v1110, 128
      %1112 = vxpose.xlu0.b32.cont [2/16] 0.0, 128
      %1113 = vxpose.xlu0.b32.cont [3/16] 0.0, 128
      %1114 = vxpose.xlu0.b32.cont [4/16] 0.0, 128
      %1115 = vxpose.xlu0.b32.cont [5/16] 0.0, 128
      %1116 = vxpose.xlu0.b32.cont [6/16] 0.0, 128
      %1117 = vxpose.xlu0.b32.cont [7/16] 0.0, 128
      %1118 = vxpose.xlu0.b32.cont [8/16] 0.0, 128
      %1119 = vxpose.xlu0.b32.cont [9/16] 0.0, 128
      %1120 = vxpose.xlu0.b32.cont [10/16] 0.0, 128
      %1121 = vxpose.xlu0.b32.cont [11/16] 0.0, 128
      %1122 = vxpose.xlu0.b32.cont [12/16] 0.0, 128
      %1123 = vxpose.xlu0.b32.cont [13/16] 0.0, 128
      %1124 = vxpose.xlu0.b32.cont [14/16] 0.0, 128
      %1125 = vxpose.xlu0.b32.cont [15/16] 0.0, 128
      %1126 = vxpose.xlu0.b32.end [16/16] 0.0, 128
      %v1127 = vpop.trf.xlu0
      %v1128 = vpop.trf.xlu0
      %v1129 = vpop.trf.xlu0
      %v1130 = vpop.trf.xlu0
      %v1131 = vpop.trf.xlu0
      %v1132 = vpop.trf.xlu0
      %v1133 = vpop.trf.xlu0
      %v1134 = vpop.trf.xlu0
      %v1135 = vpop.trf.xlu0
      %v1136 = vpop.trf.xlu0
      %v1137 = vpop.trf.xlu0
      %v1138 = vpop.trf.xlu0
      %v1139 = vpop.trf.xlu0
      %v1140 = vpop.trf.xlu0
      %v1141 = vpop.trf.xlu0
      %v1142 = vpop.trf.xlu0
      %1145 = vst [vmem:[#allocation1] ss:$2 sm:$0xff] %v1107
      %s1146 = scalar_lea.vmem [#allocation1], 16
      %1147 = vst [vmem:[%s1146] ss:$2 sm:$0xff] %v1108
      %v1148 = vld.sshfl [vmem:[#allocation1] sm:$0xff pattern:$0x75316420]
      %v1149 = vld.sshfl [vmem:[#allocation1 + $0x8] sm:$0xff pattern:$0x75316420]
      %v1150 = vld.sshfl [vmem:[#allocation1 + $0x10] sm:$0xff pattern:$0x75316420]
      %1151 = vrot.lane.b32.xlu0 %v1148, 91
      %v1152 = vpop.permute.xlu0 %1151
      %1153 = vrot.lane.b32.xlu0 %v1149, 91
      %v1154 = vpop.permute.xlu0 %1153
      %1155 = vrot.lane.b32.xlu0 %v1150, 91
      %v1156 = vpop.permute.xlu0 %1155
      %vm1157 = vcmask 744448
      %v1158 = vsel %vm1157, %v1152, %v1154
      %v1159 = vsel %vm1157, %v1154, %v1156
      %v1161 = vsel %vm304, %v1127, 0
      %v1163 = vsel %vm308, %v1158, 0
      %v1165 = vsel %vm308, %v1159, 0
      %v1167 = vsel %vm308, %v1156, 0
      %1169 = vmatpush.msra.mxu0 0.0
      %1170 = vmatpush.msra.mxu0 0.0
      %1171 = vmatpush.msra.mxu0 0.0
      %1172 = vmatpush.msra.mxu0 0.0
      %1173 = vmatpush.msra.mxu0 0.0
      %1174 = vmatpush.msra.mxu0 0.0
      %1175 = vmatpush.msra.mxu0 0.0
      %1176 = vmatpush.msra.mxu0 0.0
      %1177 = vmatpush.msra.mxu0 0.0
      %1178 = vmatpush.msra.mxu0 0.0
      %1179 = vmatpush.msra.mxu0 0.0
      %1180 = vmatpush.msra.mxu0 0.0
      %1181 = vmatpush.msra.mxu0 0.0
      %1182 = vmatpush.msra.mxu0 0.0
      %1183 = vmatpush.msra.mxu0 0.0
      %1184 = vmatpush.msra.mxu0 %v1163
      %1185 = vmatmul.f32.gmra.mxu0 %v1161
      %v1186 = vpop.f32.mrf.mxu0
      %v1187 = vadd.f32 0.0, %v1186
      %1188 = vdwg.mxu0
      %1189 = vmatpush.msra.mxu0 0.0
      %1190 = vmatpush.msra.mxu0 0.0
      %1191 = vmatpush.msra.mxu0 0.0
      %1192 = vmatpush.msra.mxu0 0.0
      %1193 = vmatpush.msra.mxu0 0.0
      %1194 = vmatpush.msra.mxu0 0.0
      %1195 = vmatpush.msra.mxu0 0.0
      %1196 = vmatpush.msra.mxu0 0.0
      %1197 = vmatpush.msra.mxu0 0.0
      %1198 = vmatpush.msra.mxu0 0.0
      %1199 = vmatpush.msra.mxu0 0.0
      %1200 = vmatpush.msra.mxu0 0.0
      %1201 = vmatpush.msra.mxu0 0.0
      %1202 = vmatpush.msra.mxu0 0.0
      %1203 = vmatpush.msra.mxu0 0.0
      %1204 = vmatpush.msra.mxu0 %v1165
      %1205 = vmatmul.f32.gmra.mxu0 %v1161
      %v1206 = vpop.f32.mrf.mxu0
      %v1207 = vadd.f32 0.0, %v1206
      %1208 = vdwg.mxu0
      %1209 = vmatpush.msra.mxu0 0.0
      %1210 = vmatpush.msra.mxu0 0.0
      %1211 = vmatpush.msra.mxu0 0.0
      %1212 = vmatpush.msra.mxu0 0.0
      %1213 = vmatpush.msra.mxu0 0.0
      %1214 = vmatpush.msra.mxu0 0.0
      %1215 = vmatpush.msra.mxu0 0.0
      %1216 = vmatpush.msra.mxu0 0.0
      %1217 = vmatpush.msra.mxu0 0.0
      %1218 = vmatpush.msra.mxu0 0.0
      %1219 = vmatpush.msra.mxu0 0.0
      %1220 = vmatpush.msra.mxu0 0.0
      %1221 = vmatpush.msra.mxu0 0.0
      %1222 = vmatpush.msra.mxu0 0.0
      %1223 = vmatpush.msra.mxu0 0.0
      %1224 = vmatpush.msra.mxu0 %v1167
      %1225 = vmatmul.f32.gmra.mxu0 %v1161
      %v1226 = vpop.f32.mrf.mxu0
      %v1227 = vadd.f32 0.0, %v1226
      %1228 = vdwg.mxu0
      %v1229 = vadd.f32 %v1104, %v1187
      %v1230 = vadd.f32 %v1105, %v1207
      %v1231 = vadd.f32 %v1106, %v1227
      %v1232 = vld [vmem:[%s236] sm:$0xff]
      %v1233 = vld [vmem:[%s236 + $0x8] sm:$0xf]
      %s1234 = scalar_lea.vmem %s227, 32
      %v1235 = vld [vmem:[%s1234] sm:$0xf]
      %1236 = vxpose.xlu0.b32.start [1/16] %v1235, 128
      %1237 = vxpose.xlu0.b32.cont [2/16] 0.0, 128
      %1238 = vxpose.xlu0.b32.cont [3/16] 0.0, 128
      %1239 = vxpose.xlu0.b32.cont [4/16] 0.0, 128
      %1240 = vxpose.xlu0.b32.cont [5/16] 0.0, 128
      %1241 = vxpose.xlu0.b32.cont [6/16] 0.0, 128
      %1242 = vxpose.xlu0.b32.cont [7/16] 0.0, 128
      %1243 = vxpose.xlu0.b32.cont [8/16] 0.0, 128
      %1244 = vxpose.xlu0.b32.cont [9/16] 0.0, 128
      %1245 = vxpose.xlu0.b32.cont [10/16] 0.0, 128
      %1246 = vxpose.xlu0.b32.cont [11/16] 0.0, 128
      %1247 = vxpose.xlu0.b32.cont [12/16] 0.0, 128
      %1248 = vxpose.xlu0.b32.cont [13/16] 0.0, 128
      %1249 = vxpose.xlu0.b32.cont [14/16] 0.0, 128
      %1250 = vxpose.xlu0.b32.cont [15/16] 0.0, 128
      %1251 = vxpose.xlu0.b32.end [16/16] 0.0, 128
      %v1252 = vpop.trf.xlu0
      %v1253 = vpop.trf.xlu0
      %v1254 = vpop.trf.xlu0
      %v1255 = vpop.trf.xlu0
      %v1256 = vpop.trf.xlu0
      %v1257 = vpop.trf.xlu0
      %v1258 = vpop.trf.xlu0
      %v1259 = vpop.trf.xlu0
      %v1260 = vpop.trf.xlu0
      %v1261 = vpop.trf.xlu0
      %v1262 = vpop.trf.xlu0
      %v1263 = vpop.trf.xlu0
      %v1264 = vpop.trf.xlu0
      %v1265 = vpop.trf.xlu0
      %v1266 = vpop.trf.xlu0
      %v1267 = vpop.trf.xlu0
      %1270 = vst [vmem:[#allocation1] ss:$2 sm:$0xff] %v1232
      %s1271 = scalar_lea.vmem [#allocation1], 16
      %1272 = vst [vmem:[%s1271] ss:$2 sm:$0xff] %v1233
      %v1273 = vld.sshfl [vmem:[#allocation1] sm:$0xff pattern:$0x75316420]
      %v1274 = vld.sshfl [vmem:[#allocation1 + $0x8] sm:$0xff pattern:$0x75316420]
      %v1275 = vld.sshfl [vmem:[#allocation1 + $0x10] sm:$0xff pattern:$0x75316420]
      %1276 = vrot.lane.b32.xlu0 %v1273, 90
      %v1277 = vpop.permute.xlu0 %1276
      %1278 = vrot.lane.b32.xlu0 %v1274, 90
      %v1279 = vpop.permute.xlu0 %1278
      %1280 = vrot.lane.b32.xlu0 %v1275, 90
      %v1281 = vpop.permute.xlu0 %1280
      %vm1282 = vcmask 736256
      %v1283 = vsel %vm1282, %v1277, %v1279
      %v1284 = vsel %vm1282, %v1279, %v1281
      %v1286 = vsel %vm304, %v1252, 0
      %v1288 = vsel %vm308, %v1283, 0
      %v1290 = vsel %vm308, %v1284, 0
      %v1292 = vsel %vm308, %v1281, 0
      %1294 = vmatpush.msra.mxu0 0.0
      %1295 = vmatpush.msra.mxu0 0.0
      %1296 = vmatpush.msra.mxu0 0.0
      %1297 = vmatpush.msra.mxu0 0.0
      %1298 = vmatpush.msra.mxu0 0.0
      %1299 = vmatpush.msra.mxu0 0.0
      %1300 = vmatpush.msra.mxu0 0.0
      %1301 = vmatpush.msra.mxu0 0.0
      %1302 = vmatpush.msra.mxu0 0.0
      %1303 = vmatpush.msra.mxu0 0.0
      %1304 = vmatpush.msra.mxu0 0.0
      %1305 = vmatpush.msra.mxu0 0.0
      %1306 = vmatpush.msra.mxu0 0.0
      %1307 = vmatpush.msra.mxu0 0.0
      %1308 = vmatpush.msra.mxu0 0.0
      %1309 = vmatpush.msra.mxu0 %v1288
      %1310 = vmatmul.f32.gmra.mxu0 %v1286
      %v1311 = vpop.f32.mrf.mxu0
      %v1312 = vadd.f32 0.0, %v1311
      %1313 = vdwg.mxu0
      %1314 = vmatpush.msra.mxu0 0.0
      %1315 = vmatpush.msra.mxu0 0.0
      %1316 = vmatpush.msra.mxu0 0.0
      %1317 = vmatpush.msra.mxu0 0.0
      %1318 = vmatpush.msra.mxu0 0.0
      %1319 = vmatpush.msra.mxu0 0.0
      %1320 = vmatpush.msra.mxu0 0.0
      %1321 = vmatpush.msra.mxu0 0.0
      %1322 = vmatpush.msra.mxu0 0.0
      %1323 = vmatpush.msra.mxu0 0.0
      %1324 = vmatpush.msra.mxu0 0.0
      %1325 = vmatpush.msra.mxu0 0.0
      %1326 = vmatpush.msra.mxu0 0.0
      %1327 = vmatpush.msra.mxu0 0.0
      %1328 = vmatpush.msra.mxu0 0.0
      %1329 = vmatpush.msra.mxu0 %v1290
      %1330 = vmatmul.f32.gmra.mxu0 %v1286
      %v1331 = vpop.f32.mrf.mxu0
      %v1332 = vadd.f32 0.0, %v1331
      %1333 = vdwg.mxu0
      %1334 = vmatpush.msra.mxu0 0.0
      %1335 = vmatpush.msra.mxu0 0.0
      %1336 = vmatpush.msra.mxu0 0.0
      %1337 = vmatpush.msra.mxu0 0.0
      %1338 = vmatpush.msra.mxu0 0.0
      %1339 = vmatpush.msra.mxu0 0.0
      %1340 = vmatpush.msra.mxu0 0.0
      %1341 = vmatpush.msra.mxu0 0.0
      %1342 = vmatpush.msra.mxu0 0.0
      %1343 = vmatpush.msra.mxu0 0.0
      %1344 = vmatpush.msra.mxu0 0.0
      %1345 = vmatpush.msra.mxu0 0.0
      %1346 = vmatpush.msra.mxu0 0.0
      %1347 = vmatpush.msra.mxu0 0.0
      %1348 = vmatpush.msra.mxu0 0.0
      %1349 = vmatpush.msra.mxu0 %v1292
      %1350 = vmatmul.f32.gmra.mxu0 %v1286
      %v1351 = vpop.f32.mrf.mxu0
      %v1352 = vadd.f32 0.0, %v1351
      %1353 = vdwg.mxu0
      %v1354 = vadd.f32 %v1229, %v1312
      %v1355 = vadd.f32 %v1230, %v1332
      %v1356 = vadd.f32 %v1231, %v1352
      %v1357 = vld [vmem:[#allocation2] sm:$0xff]
      %v1358 = vld [vmem:[#allocation2 + $0x8] sm:$0xff]
      %v1359 = vld [vmem:[#allocation2 + $0x10] sm:$0xff]
      %v1360 = vadd.f32 %v1357, %v1354
      %v1361 = vadd.f32 %v1358, %v1355
      %v1362 = vadd.f32 %v1359, %v1356
      %1363 = vst [vmem:[#allocation2] sm:$0xff] %v1360
      %1364 = vst [vmem:[#allocation2 + $0x8] sm:$0xff] %v1361
      %vm1365 = vcmask 244736
      %1366 = vst.msk [vmem:[#allocation2 + $0x10] sm:$0xff] %vm1365, %v1362
      // Predicated region
      $region41: #{_lambda_.3} parent=35 // pred_check
        %p1367 = pneg %p242
      $region42: #{_lambda_.3} parent=35 // pred_check_branch
        %1369 = sbr.rel (%p1367) target = $region44
      $region43: #{_lambda_.3} parent=35 // pred_region
        %v1370 = vld [vmem:[#allocation2] sm:$0xff]
        %v1371 = vld [vmem:[#allocation2 + $0x8] sm:$0xff]
        %v1372 = vld [vmem:[#allocation2 + $0x10] sm:$0xff]
        %s1373 = sld [smem:[#allocation3]]
        %v1374 = vstv %s1373
        %v1375 = vmul.f32 %v1370, %v1374
        %v1376 = vmul.f32 %v1371, %v1374
        %v1377 = vmul.f32 %v1372, %v1374
        %v1378 = vld [vmem:[%s2] sm:$0xff]
        %1380 = vset.pattern.permute.xlu0 0
        %1381 = vperm.xlu0 %1380, %v1378
        %v1382 = vpop.permute.xlu0 %1381
        %v1384 = vadd.f32 %v1375, %v1382
        %v1385 = vadd.f32 %v1376, %v1382
        %v1386 = vadd.f32 %v1377, %v1382
        %1387 = vst [vmem:[%s241] sm:$0xff] %v1384
        %1388 = vst [vmem:[%s241 + $0x8] sm:$0xff] %v1385
        %1389 = vst.msk [vmem:[%s241 + $0x10] sm:$0xff] %vm1365, %v1386
      $region44: #{_lambda_.3} parent=35 // pred_fallthru
        _
      %p1390 = scmp.lt.s32.totalorder %s20, 1
      %s1391 = scalar_select %p1390, %s20, 1
      %s1392 = smul.addr %s1391, 3
      %s1393 = smul.addr %s1392, 8
      %s1394 = scalar_lea.vmem %s4, %s1393
      // Predicated region
      $region45: #{_lambda_.3} parent=35 // pred_check
        %p1395 = pneg %p142
      $region46: #{_lambda_.3} parent=35 // pred_check_branch
        %1397 = sbr.rel (%p1395) target = $region48
      $region47: #{_lambda_.3} parent=35 // pred_region
        _
      $region48: #{_lambda_.3} parent=35 // pred_fallthru
        _
    $region36: #{_lambda_.3} parent=5 // pred_fallthru
      _
    %p1398 = scmp.le.s32.totalorder 2, %s11
    // Predicated region
    $region49: #{_lambda_.3} parent=5 // pred_check
      %p1399 = pneg %p1398
    $region50: #{_lambda_.3} parent=5 // pred_check_branch
      %1401 = sbr.rel (%p1399) target = $region52
    $region51: #{_lambda_.3} parent=5 // pred_region
      %s1402 = ssub.s32 %s11, 2
      // Predicated region
      $region53: #{_lambda_.3} parent=51 // pred_check
        %p1403 = pneg %p148
      $region54: #{_lambda_.3} parent=51 // pred_check_branch
        %1405 = sbr.rel (%p1403) target = $region56
      $region55: #{_lambda_.3} parent=51 // pred_region
        %p1406 = scmp.lt.s32.totalorder %s22, 1
        %s1407 = scalar_select %p1406, %s22, 1
        %s1408 = smul.addr %s1407, 3
        %s1409 = smul.addr %s1408, 8
        %s1410 = scalar_lea.vmem %s4, %s1409
      $region56: #{_lambda_.3} parent=51 // pred_fallthru
        _
    $region52: #{_lambda_.3} parent=5 // pred_fallthru
      _
  $region6: #{_lambda_.3} parent=0 // loop_footer
    %s15 = sadd.s32 1, %s11
  $region7: #{_lambda_.3} parent=0 // loop_footer_branch
    %10 = sbr.rel target = $region3
  $region8: #{_lambda_.3} parent=0 // loop_exit
    _

</llo_original>
